<compile_context>
chip_gen: v7x
topology: tpu7x:2x2x1
jax: 0.10.0
libtpu: 0.0.40
codegen_flags: <defaults>
</compile_context>

<pallas_src>
import jax
import jax.numpy as jnp
from jax.experimental import pallas as pl
from jax.experimental.pallas import tpu as pltpu

# Problem sizes (ratio=16 as in the module, so C must be >= 16).
B, C, H, W = 2, 32, 16, 16
RATIO = 16
HID = C // RATIO            # 2
K = 7                       # spatial-attention kernel size
PAD = 3                     # padding for kernel_size=7

HW = H * W                  # 256  lane-dense flattened spatial dim
OFF = PAD * W + PAD         # 51   flat offset of the data inside the padded buffer
SW = (K - 1) * W + HW       # 352  stacked-buffer columns actually read by the conv
SW_STORE = 384              # lane-aligned (3*128) stored width of the stacked buffer
PLEN = (K - 1) + SW_STORE   # 390  flat padded buffer length (>= 2*OFF + HW = 358)
TRAIL = PLEN - OFF - HW     # 83   trailing zeros (>= OFF absorbs worst row overflow)
# NOTE: the flat row-padded shift scheme (OFF/PLEN/SW) is derived for exactly
# this (K=7, PAD=3, W=16); re-derive before generalizing W, K or stride.


def _make_cbam_kernel(bb):
    """CBAM forward on a block of `bb` batch elements, each a (C, HW) tile."""

    def kernel(x_ref, w1t_ref, w2_ref, wc_ref, o_ref, stk_ref):
        # Weights / constants hoisted out of the batch loop.
        w1t = w1t_ref[...].astype(jnp.float32)          # (C, HID)   = W1^T
        w2 = w2_ref[...].astype(jnp.float32)            # (C, HID)   = W2
        wc = wc_ref[...].astype(jnp.float32)            # (2K, K) row=2*dj+ch, col=di

        # Per-dj column-validity masks: a horizontal tap that falls off a row
        # would wrap into the neighbouring row in the flat layout, so it must
        # read 0.  The mask only depends on (lane index mod W) and dj — the
        # same for every vertical offset di — so it can be baked into the
        # stacked buffer once.
        lane = jax.lax.broadcasted_iota(jnp.int32, (1, SW_STORE), 1)
        qcol = lane & (W - 1) if (W & (W - 1)) == 0 else lane % W
        col_masks = []
        for dj in range(K):
            o = dj - PAD
            col_masks.append((qcol + o >= 0) & (qcol + o <= W - 1))  # (1, SW_STORE)

        for b in range(bb):
            x = x_ref[b].astype(jnp.float32)             # (C, HW)

            # ---------------- Channel attention (VPU/XLU only, no MXU) ------
            avg_p = jnp.mean(x, axis=1, keepdims=True)   # (C, 1) lane reduce
            max_p = jnp.max(x, axis=1, keepdims=True)    # (C, 1)
            # shared MLP: relu(W1 @ pool) as broadcast-mul + sublane reduce
            h_avg = jnp.maximum(
                jnp.sum(w1t * avg_p, axis=0, keepdims=True), 0.0)   # (1, HID)
            h_max = jnp.maximum(
                jnp.sum(w1t * max_p, axis=0, keepdims=True), 0.0)   # (1, HID)
            h = h_avg + h_max                            # W2 is linear -> sum first
            y = jnp.sum(w2 * h, axis=1, keepdims=True)   # (C, 1) lane reduce
            ca = jax.nn.sigmoid(y)                       # (C, 1)
            x1 = x * ca                                  # (C, HW)

            # ---------------- Spatial attention -----------------------------
            avg_c = jnp.mean(x1, axis=0, keepdims=True)  # (1, HW) sublane reduce
            max_c = jnp.max(x1, axis=0, keepdims=True)   # (1, HW)

            # Flat row-padded buffer: data(i, j) of channel ch lives at flat
            # index OFF + i*W + j; the zero pads absorb every vertical
            # out-of-range tap, so tap (di, dj) is the constant-shift slice
            # [di*W + dj : +HW].
            am = jnp.concatenate([avg_c, max_c], axis=0)            # (2, HW)
            pm2 = jnp.concatenate(
                [jnp.zeros((2, OFF), jnp.float32), am,
                 jnp.zeros((2, TRAIL), jnp.float32)], axis=1)       # (2, PLEN)

            # Build the dj-pre-shifted, pre-masked, sublane-stacked buffer in
            # VMEM scratch: row 2*dj + ch holds channel ch shifted left by dj
            # with the horizontal-validity mask already applied.
            for dj in range(K):
                piece = jnp.where(col_masks[dj],
                                  pm2[:, dj:dj + SW_STORE], 0.0)    # (2, SW_STORE)
                stk_ref[2 * dj:2 * dj + 2, :] = piece

            stk = stk_ref[...]                                      # (2K, SW_STORE)

            # 7x7 conv = 7 vertical offsets; each is ONE static lane slice of
            # the stacked buffer FMA'd against a (2K, 1) weight column, then a
            # single sublane-sum reduce.
            acc = jnp.zeros((2 * K, HW), jnp.float32)
            for di in range(K):
                acc = acc + stk[:, di * W:di * W + HW] * wc[:, di:di + 1]
            sa = jax.nn.sigmoid(jnp.sum(acc, axis=0, keepdims=True))  # (1, HW)

            o_ref[b] = (x1 * sa).astype(o_ref.dtype)     # unmasked full-lane store

    return kernel


def _tensorcores_per_device() -> int:
    """2 on megacore parts (v7x, v4/v5p), 1 on v5e/v6e."""
    try:
        kind = jax.devices()[0].device_kind.lower()
    except Exception:
        return 1
    return 2 if ("v7" in kind or "v4" in kind or "v5p" in kind) else 1


def cbam_pallas(x, w1, w2, wsa):
    b, c, h, w = x.shape
    hw = h * w

    # Lane-dense view: each batch element is a (C, 256) tile.
    x2 = x.reshape(b, c, hw)
    # Pre-transpose the 1x1-conv weights so the kernel never transposes.
    w1t = jnp.transpose(w1)                               # (C, HID)
    # Spatial-conv weights rearranged to (2K, K): row = 2*dj + ch, column = di.
    wconv = jnp.transpose(wsa, (2, 0, 1)).reshape(2 * K, K)

    # Single-TC chips (v5e/v6e): fold the whole batch into one grid step to
    # avoid per-step overhead.  Dual-TC chips (v7x): keep grid=(B,) "parallel"
    # so the two TensorCores split the batch.
    bb = 1 if (_tensorcores_per_device() > 1 and b > 1) else b
    grid = (b // bb,)

    # NOTE: at production CBAM sizes (C >= 256, H = W >= 56) the (bb, C, HW)
    # block is double-buffered for input and output; split HW (multiples of
    # 128) or C onto an extra grid axis and/or set vmem_limit_bytes — v7x only
    # has 64 MiB physical VMEM.
    out2 = pl.pallas_call(
        _make_cbam_kernel(bb),
        out_shape=jax.ShapeDtypeStruct((b, c, hw), x.dtype),
        grid_spec=pltpu.PrefetchScalarGridSpec(
            num_scalar_prefetch=0,
            grid=grid,
            in_specs=[
                pl.BlockSpec((bb, c, hw), lambda i: (i, 0, 0)),
                pl.BlockSpec((c, HID), lambda i: (0, 0)),      # VMEM-resident
                pl.BlockSpec((c, HID), lambda i: (0, 0)),      # VMEM-resident
                pl.BlockSpec((2 * K, K), lambda i: (0, 0)),    # VMEM-resident
            ],
            out_specs=pl.BlockSpec((bb, c, hw), lambda i: (i, 0, 0)),
            scratch_shapes=[pltpu.VMEM((2 * K, SW_STORE), jnp.float32)],
        ),
        compiler_params=pltpu.CompilerParams(
            dimension_semantics=("parallel",)),
    )(x2, w1t, w2, wconv)
    return out2.reshape(b, c, h, w)


def cbam_reference(x, w1, w2, wsa):
    """Plain-JAX reference matching the PyTorch module semantics."""
    xf = x.astype(jnp.float32)
    avg_p = jnp.mean(xf, axis=(2, 3))                     # (B, C)
    max_p = jnp.max(xf, axis=(2, 3))                      # (B, C)

    def mlp(v):                                           # (B, C)
        hh = jnp.maximum(v @ w1.T, 0.0)                   # (B, HID)
        return hh @ w2.T                                  # (B, C)

    ca = jax.nn.sigmoid(mlp(avg_p) + mlp(max_p))          # (B, C)
    x1 = xf * ca[:, :, None, None]

    avg_c = jnp.mean(x1, axis=1, keepdims=True)           # (B, 1, H, W)
    max_c = jnp.max(x1, axis=1, keepdims=True)            # (B, 1, H, W)
    cat = jnp.concatenate([avg_c, max_c], axis=1)         # (B, 2, H, W)
    sa = jax.lax.conv_general_dilated(
        cat, wsa[None],                                   # (1, 2, K, K)
        window_strides=(1, 1), padding=((PAD, PAD), (PAD, PAD)),
        dimension_numbers=("NCHW", "OIHW", "NCHW"))
    sa = jax.nn.sigmoid(sa)                               # (B, 1, H, W)
    return (x1 * sa).astype(x.dtype)


if __name__ == "__main__":
    key = jax.random.PRNGKey(0)
    kx, k1, k2, k3 = jax.random.split(key, 4)

    x = jax.random.normal(kx, (B, C, H, W), jnp.float32)
    # Conv2d(C, C//ratio, 1, bias=False) weight -> (HID, C)
    w1 = jax.random.normal(k1, (HID, C), jnp.float32) * 0.3
    # Conv2d(C//ratio, C, 1, bias=False) weight -> (C, HID)
    w2 = jax.random.normal(k2, (C, HID), jnp.float32) * 0.3
    # Conv2d(2, 1, 7, padding=3, bias=False) weight -> (2, K, K)
    wsa = jax.random.normal(k3, (2, K, K), jnp.float32) * 0.1

    out = jax.jit(cbam_pallas)(x, w1, w2, wsa)
    out = jax.block_until_ready(out)

    ref = cbam_reference(x, w1, w2, wsa)
    assert out.shape == (B, C, H, W)
    assert jnp.allclose(out, ref, atol=1e-4, rtol=1e-4), (
        f"max abs diff {jnp.max(jnp.abs(out - ref))}")

    print("KERNEL_OK")
</pallas_src>

<mosaic_0001>
module attributes {stable_mosaic.version = 11 : i64} {
  func.func @kernel(%arg0: i32, %arg1: memref<2x32x256xf32, #tpu.memory_space<vmem>>, %arg2: memref<32x2xf32, #tpu.memory_space<vmem>>, %arg3: memref<32x2xf32, #tpu.memory_space<vmem>>, %arg4: memref<14x7xf32, #tpu.memory_space<vmem>>, %arg5: memref<2x32x256xf32, #tpu.memory_space<vmem>>, %arg6: memref<14x384xf32, #tpu.memory_space<vmem>>) attributes {dimension_semantics = [#tpu.dimension_semantics<parallel>], iteration_bounds = array<i64: 1>, scalar_prefetch = 0 : i64, scratch_operands = 1 : i64, tpu.core_type = #tpu.core_type<tc>, window_params = [{transform_indices = @transform_0, window_bounds = array<i64: 2, 32, 256>}, {pipeline_mode = #tpu.pipeline_mode<synchronous>, transform_indices = @transform_1, window_bounds = array<i64: 32, 2>}, {pipeline_mode = #tpu.pipeline_mode<synchronous>, transform_indices = @transform_2, window_bounds = array<i64: 32, 2>}, {pipeline_mode = #tpu.pipeline_mode<synchronous>, transform_indices = @transform_3, window_bounds = array<i64: 14, 7>}, {transform_indices = @transform_4, window_bounds = array<i64: 2, 32, 256>}]} {
    %c0 = arith.constant 0 : index
    %c0_0 = arith.constant 0 : index
    %0 = vector.load %arg2[%c0, %c0_0] : memref<32x2xf32, #tpu.memory_space<vmem>>, vector<32x2xf32>
    %c0_1 = arith.constant 0 : index
    %c0_2 = arith.constant 0 : index
    %1 = vector.load %arg3[%c0_1, %c0_2] : memref<32x2xf32, #tpu.memory_space<vmem>>, vector<32x2xf32>
    %c0_3 = arith.constant 0 : index
    %c0_4 = arith.constant 0 : index
    %2 = vector.load %arg4[%c0_3, %c0_4] : memref<14x7xf32, #tpu.memory_space<vmem>>, vector<14x7xf32>
    %3 = tpu.iota {dimensions = array<i32: 1>} : vector<1x384xi32>
    %c15_i32 = arith.constant 15 : i32
    %4 = vector.broadcast %c15_i32 : i32 to vector<1x384xi32>
    %5 = arith.andi %3, %4 : vector<1x384xi32>
    %c-3_i32 = arith.constant -3 : i32
    %6 = vector.broadcast %c-3_i32 : i32 to vector<1x384xi32>
    %7 = arith.addi %5, %6 : vector<1x384xi32>
    %c0_i32 = arith.constant 0 : i32
    %8 = vector.broadcast %c0_i32 : i32 to vector<1x384xi32>
    %9 = arith.cmpi sge, %7, %8 : vector<1x384xi32>
    %c-3_i32_5 = arith.constant -3 : i32
    %10 = vector.broadcast %c-3_i32_5 : i32 to vector<1x384xi32>
    %11 = arith.addi %5, %10 : vector<1x384xi32>
    %c15_i32_6 = arith.constant 15 : i32
    %12 = vector.broadcast %c15_i32_6 : i32 to vector<1x384xi32>
    %13 = arith.cmpi sle, %11, %12 : vector<1x384xi32>
    %14 = arith.andi %9, %13 : vector<1x384xi1>
    %c-2_i32 = arith.constant -2 : i32
    %15 = vector.broadcast %c-2_i32 : i32 to vector<1x384xi32>
    %16 = arith.addi %5, %15 : vector<1x384xi32>
    %c0_i32_7 = arith.constant 0 : i32
    %17 = vector.broadcast %c0_i32_7 : i32 to vector<1x384xi32>
    %18 = arith.cmpi sge, %16, %17 : vector<1x384xi32>
    %c-2_i32_8 = arith.constant -2 : i32
    %19 = vector.broadcast %c-2_i32_8 : i32 to vector<1x384xi32>
    %20 = arith.addi %5, %19 : vector<1x384xi32>
    %c15_i32_9 = arith.constant 15 : i32
    %21 = vector.broadcast %c15_i32_9 : i32 to vector<1x384xi32>
    %22 = arith.cmpi sle, %20, %21 : vector<1x384xi32>
    %23 = arith.andi %18, %22 : vector<1x384xi1>
    %c-1_i32 = arith.constant -1 : i32
    %24 = vector.broadcast %c-1_i32 : i32 to vector<1x384xi32>
    %25 = arith.addi %5, %24 : vector<1x384xi32>
    %c0_i32_10 = arith.constant 0 : i32
    %26 = vector.broadcast %c0_i32_10 : i32 to vector<1x384xi32>
    %27 = arith.cmpi sge, %25, %26 : vector<1x384xi32>
    %c-1_i32_11 = arith.constant -1 : i32
    %28 = vector.broadcast %c-1_i32_11 : i32 to vector<1x384xi32>
    %29 = arith.addi %5, %28 : vector<1x384xi32>
    %c15_i32_12 = arith.constant 15 : i32
    %30 = vector.broadcast %c15_i32_12 : i32 to vector<1x384xi32>
    %31 = arith.cmpi sle, %29, %30 : vector<1x384xi32>
    %32 = arith.andi %27, %31 : vector<1x384xi1>
    %c0_i32_13 = arith.constant 0 : i32
    %33 = vector.broadcast %c0_i32_13 : i32 to vector<1x384xi32>
    %34 = arith.addi %5, %33 : vector<1x384xi32>
    %c0_i32_14 = arith.constant 0 : i32
    %35 = vector.broadcast %c0_i32_14 : i32 to vector<1x384xi32>
    %36 = arith.cmpi sge, %34, %35 : vector<1x384xi32>
    %c0_i32_15 = arith.constant 0 : i32
    %37 = vector.broadcast %c0_i32_15 : i32 to vector<1x384xi32>
    %38 = arith.addi %5, %37 : vector<1x384xi32>
    %c15_i32_16 = arith.constant 15 : i32
    %39 = vector.broadcast %c15_i32_16 : i32 to vector<1x384xi32>
    %40 = arith.cmpi sle, %38, %39 : vector<1x384xi32>
    %41 = arith.andi %36, %40 : vector<1x384xi1>
    %c1_i32 = arith.constant 1 : i32
    %42 = vector.broadcast %c1_i32 : i32 to vector<1x384xi32>
    %43 = arith.addi %5, %42 : vector<1x384xi32>
    %c0_i32_17 = arith.constant 0 : i32
    %44 = vector.broadcast %c0_i32_17 : i32 to vector<1x384xi32>
    %45 = arith.cmpi sge, %43, %44 : vector<1x384xi32>
    %c1_i32_18 = arith.constant 1 : i32
    %46 = vector.broadcast %c1_i32_18 : i32 to vector<1x384xi32>
    %47 = arith.addi %5, %46 : vector<1x384xi32>
    %c15_i32_19 = arith.constant 15 : i32
    %48 = vector.broadcast %c15_i32_19 : i32 to vector<1x384xi32>
    %49 = arith.cmpi sle, %47, %48 : vector<1x384xi32>
    %50 = arith.andi %45, %49 : vector<1x384xi1>
    %c2_i32 = arith.constant 2 : i32
    %51 = vector.broadcast %c2_i32 : i32 to vector<1x384xi32>
    %52 = arith.addi %5, %51 : vector<1x384xi32>
    %c0_i32_20 = arith.constant 0 : i32
    %53 = vector.broadcast %c0_i32_20 : i32 to vector<1x384xi32>
    %54 = arith.cmpi sge, %52, %53 : vector<1x384xi32>
    %c2_i32_21 = arith.constant 2 : i32
    %55 = vector.broadcast %c2_i32_21 : i32 to vector<1x384xi32>
    %56 = arith.addi %5, %55 : vector<1x384xi32>
    %c15_i32_22 = arith.constant 15 : i32
    %57 = vector.broadcast %c15_i32_22 : i32 to vector<1x384xi32>
    %58 = arith.cmpi sle, %56, %57 : vector<1x384xi32>
    %59 = arith.andi %54, %58 : vector<1x384xi1>
    %c3_i32 = arith.constant 3 : i32
    %60 = vector.broadcast %c3_i32 : i32 to vector<1x384xi32>
    %61 = arith.addi %5, %60 : vector<1x384xi32>
    %c0_i32_23 = arith.constant 0 : i32
    %62 = vector.broadcast %c0_i32_23 : i32 to vector<1x384xi32>
    %63 = arith.cmpi sge, %61, %62 : vector<1x384xi32>
    %c3_i32_24 = arith.constant 3 : i32
    %64 = vector.broadcast %c3_i32_24 : i32 to vector<1x384xi32>
    %65 = arith.addi %5, %64 : vector<1x384xi32>
    %c15_i32_25 = arith.constant 15 : i32
    %66 = vector.broadcast %c15_i32_25 : i32 to vector<1x384xi32>
    %67 = arith.cmpi sle, %65, %66 : vector<1x384xi32>
    %68 = arith.andi %63, %67 : vector<1x384xi1>
    %c0_26 = arith.constant 0 : index
    %c0_27 = arith.constant 0 : index
    %c0_28 = arith.constant 0 : index
    %69 = vector.load %arg1[%c0_26, %c0_27, %c0_28] : memref<2x32x256xf32, #tpu.memory_space<vmem>>, vector<1x32x256xf32>
    %70 = vector.shape_cast %69 : vector<1x32x256xf32> to vector<32x256xf32>
    %cst = arith.constant dense<0.000000e+00> : vector<32xf32>
    %71 = vector.multi_reduction <add>, %70, %cst [1] : vector<32x256xf32> to vector<32xf32>
    %72 = vector.shape_cast %71 : vector<32xf32> to vector<32x1xf32>
    %cst_29 = arith.constant 2.560000e+02 : f32
    %73 = vector.broadcast %cst_29 : f32 to vector<32x1xf32>
    %74 = arith.divf %72, %73 : vector<32x1xf32>
    %cst_30 = arith.constant dense<0xFF800000> : vector<32xf32>
    %75 = vector.multi_reduction <maximumf>, %70, %cst_30 [1] : vector<32x256xf32> to vector<32xf32>
    %76 = vector.shape_cast %75 : vector<32xf32> to vector<32x1xf32>
    %77 = vector.broadcast %74 : vector<32x1xf32> to vector<32x2xf32>
    %78 = arith.mulf %0, %77 : vector<32x2xf32>
    %cst_31 = arith.constant dense<0.000000e+00> : vector<2xf32>
    %79 = vector.multi_reduction <add>, %78, %cst_31 [0] : vector<32x2xf32> to vector<2xf32>
    %80 = vector.shape_cast %79 : vector<2xf32> to vector<1x2xf32>
    %cst_32 = arith.constant 0.000000e+00 : f32
    %81 = vector.broadcast %cst_32 : f32 to vector<1x2xf32>
    %82 = arith.maximumf %80, %81 : vector<1x2xf32>
    %83 = vector.broadcast %76 : vector<32x1xf32> to vector<32x2xf32>
    %84 = arith.mulf %0, %83 : vector<32x2xf32>
    %cst_33 = arith.constant dense<0.000000e+00> : vector<2xf32>
    %85 = vector.multi_reduction <add>, %84, %cst_33 [0] : vector<32x2xf32> to vector<2xf32>
    %86 = vector.shape_cast %85 : vector<2xf32> to vector<1x2xf32>
    %cst_34 = arith.constant 0.000000e+00 : f32
    %87 = vector.broadcast %cst_34 : f32 to vector<1x2xf32>
    %88 = arith.maximumf %86, %87 : vector<1x2xf32>
    %89 = arith.addf %82, %88 : vector<1x2xf32>
    %90 = vector.broadcast %89 : vector<1x2xf32> to vector<32x2xf32>
    %91 = arith.mulf %1, %90 : vector<32x2xf32>
    %cst_35 = arith.constant dense<0.000000e+00> : vector<32xf32>
    %92 = vector.multi_reduction <add>, %91, %cst_35 [1] : vector<32x2xf32> to vector<32xf32>
    %93 = vector.shape_cast %92 : vector<32xf32> to vector<32x1xf32>
    %94 = arith.negf %93 : vector<32x1xf32>
    %95 = math.exp %94 : vector<32x1xf32>
    %cst_36 = arith.constant 1.000000e+00 : f32
    %96 = vector.broadcast %cst_36 : f32 to vector<32x1xf32>
    %97 = arith.addf %96, %95 : vector<32x1xf32>
    %98 = arith.divf %96, %97 : vector<32x1xf32>
    %99 = vector.broadcast %98 : vector<32x1xf32> to vector<32x256xf32>
    %100 = arith.mulf %70, %99 : vector<32x256xf32>
    %cst_37 = arith.constant dense<0.000000e+00> : vector<256xf32>
    %101 = vector.multi_reduction <add>, %100, %cst_37 [0] : vector<32x256xf32> to vector<256xf32>
    %102 = vector.shape_cast %101 : vector<256xf32> to vector<1x256xf32>
    %cst_38 = arith.constant 3.200000e+01 : f32
    %103 = vector.broadcast %cst_38 : f32 to vector<1x256xf32>
    %104 = arith.divf %102, %103 : vector<1x256xf32>
    %cst_39 = arith.constant dense<0xFF800000> : vector<256xf32>
    %105 = vector.multi_reduction <maximumf>, %100, %cst_39 [0] : vector<32x256xf32> to vector<256xf32>
    %106 = vector.shape_cast %105 : vector<256xf32> to vector<1x256xf32>
    %107 = tpu.concatenate %104, %106 in 0 : vector<1x256xf32>, vector<1x256xf32> -> vector<2x256xf32>
    %cst_40 = arith.constant 0.000000e+00 : f32
    %108 = vector.broadcast %cst_40 : f32 to vector<2x51xf32>
    %cst_41 = arith.constant 0.000000e+00 : f32
    %109 = vector.broadcast %cst_41 : f32 to vector<2x83xf32>
    %110 = tpu.concatenate %108, %107, %109 in 1 : vector<2x51xf32>, vector<2x256xf32>, vector<2x83xf32> -> vector<2x390xf32>
    %111 = vector.extract_strided_slice %110 {offsets = [0, 0], sizes = [2, 384], strides = [1, 1]} : vector<2x390xf32> to vector<2x384xf32>
    %cst_42 = arith.constant 0.000000e+00 : f32
    %112 = vector.shape_cast %14 : vector<1x384xi1> to vector<1x384xi1>
    %113 = vector.broadcast %112 : vector<1x384xi1> to vector<2x384xi1>
    %114 = vector.broadcast %cst_42 : f32 to vector<2x384xf32>
    %115 = arith.select %113, %111, %114 : vector<2x384xi1>, vector<2x384xf32>
    %c0_43 = arith.constant 0 : index
    %c0_44 = arith.constant 0 : index
    %116 = vector.load %arg6[%c0_43, %c0_44] : memref<14x384xf32, #tpu.memory_space<vmem>>, vector<2x384xf32>
    tpu.vector_store %arg6[%c0_43, %c0_44], %115 {strides = array<i32>} : memref<14x384xf32, #tpu.memory_space<vmem>>, vector<2x384xf32>,
    %117 = vector.extract_strided_slice %110 {offsets = [0, 1], sizes = [2, 384], strides = [1, 1]} : vector<2x390xf32> to vector<2x384xf32>
    %cst_45 = arith.constant 0.000000e+00 : f32
    %118 = vector.shape_cast %23 : vector<1x384xi1> to vector<1x384xi1>
    %119 = vector.broadcast %118 : vector<1x384xi1> to vector<2x384xi1>
    %120 = vector.broadcast %cst_45 : f32 to vector<2x384xf32>
    %121 = arith.select %119, %117, %120 : vector<2x384xi1>, vector<2x384xf32>
    %c2 = arith.constant 2 : index
    %c0_46 = arith.constant 0 : index
    %122 = vector.load %arg6[%c2, %c0_46] : memref<14x384xf32, #tpu.memory_space<vmem>>, vector<2x384xf32>
    tpu.vector_store %arg6[%c2, %c0_46], %121 {strides = array<i32>} : memref<14x384xf32, #tpu.memory_space<vmem>>, vector<2x384xf32>,
    %123 = vector.extract_strided_slice %110 {offsets = [0, 2], sizes = [2, 384], strides = [1, 1]} : vector<2x390xf32> to vector<2x384xf32>
    %cst_47 = arith.constant 0.000000e+00 : f32
    %124 = vector.shape_cast %32 : vector<1x384xi1> to vector<1x384xi1>
    %125 = vector.broadcast %124 : vector<1x384xi1> to vector<2x384xi1>
    %126 = vector.broadcast %cst_47 : f32 to vector<2x384xf32>
    %127 = arith.select %125, %123, %126 : vector<2x384xi1>, vector<2x384xf32>
    %c4 = arith.constant 4 : index
    %c0_48 = arith.constant 0 : index
    %128 = vector.load %arg6[%c4, %c0_48] : memref<14x384xf32, #tpu.memory_space<vmem>>, vector<2x384xf32>
    tpu.vector_store %arg6[%c4, %c0_48], %127 {strides = array<i32>} : memref<14x384xf32, #tpu.memory_space<vmem>>, vector<2x384xf32>,
    %129 = vector.extract_strided_slice %110 {offsets = [0, 3], sizes = [2, 384], strides = [1, 1]} : vector<2x390xf32> to vector<2x384xf32>
    %cst_49 = arith.constant 0.000000e+00 : f32
    %130 = vector.shape_cast %41 : vector<1x384xi1> to vector<1x384xi1>
    %131 = vector.broadcast %130 : vector<1x384xi1> to vector<2x384xi1>
    %132 = vector.broadcast %cst_49 : f32 to vector<2x384xf32>
    %133 = arith.select %131, %129, %132 : vector<2x384xi1>, vector<2x384xf32>
    %c6 = arith.constant 6 : index
    %c0_50 = arith.constant 0 : index
    %134 = vector.load %arg6[%c6, %c0_50] : memref<14x384xf32, #tpu.memory_space<vmem>>, vector<2x384xf32>
    tpu.vector_store %arg6[%c6, %c0_50], %133 {strides = array<i32>} : memref<14x384xf32, #tpu.memory_space<vmem>>, vector<2x384xf32>,
    %135 = vector.extract_strided_slice %110 {offsets = [0, 4], sizes = [2, 384], strides = [1, 1]} : vector<2x390xf32> to vector<2x384xf32>
    %cst_51 = arith.constant 0.000000e+00 : f32
    %136 = vector.shape_cast %50 : vector<1x384xi1> to vector<1x384xi1>
    %137 = vector.broadcast %136 : vector<1x384xi1> to vector<2x384xi1>
    %138 = vector.broadcast %cst_51 : f32 to vector<2x384xf32>
    %139 = arith.select %137, %135, %138 : vector<2x384xi1>, vector<2x384xf32>
    %c8 = arith.constant 8 : index
    %c0_52 = arith.constant 0 : index
    %140 = vector.load %arg6[%c8, %c0_52] : memref<14x384xf32, #tpu.memory_space<vmem>>, vector<2x384xf32>
    tpu.vector_store %arg6[%c8, %c0_52], %139 {strides = array<i32>} : memref<14x384xf32, #tpu.memory_space<vmem>>, vector<2x384xf32>,
    %141 = vector.extract_strided_slice %110 {offsets = [0, 5], sizes = [2, 384], strides = [1, 1]} : vector<2x390xf32> to vector<2x384xf32>
    %cst_53 = arith.constant 0.000000e+00 : f32
    %142 = vector.shape_cast %59 : vector<1x384xi1> to vector<1x384xi1>
    %143 = vector.broadcast %142 : vector<1x384xi1> to vector<2x384xi1>
    %144 = vector.broadcast %cst_53 : f32 to vector<2x384xf32>
    %145 = arith.select %143, %141, %144 : vector<2x384xi1>, vector<2x384xf32>
    %c10 = arith.constant 10 : index
    %c0_54 = arith.constant 0 : index
    %146 = vector.load %arg6[%c10, %c0_54] : memref<14x384xf32, #tpu.memory_space<vmem>>, vector<2x384xf32>
    tpu.vector_store %arg6[%c10, %c0_54], %145 {strides = array<i32>} : memref<14x384xf32, #tpu.memory_space<vmem>>, vector<2x384xf32>,
    %147 = vector.extract_strided_slice %110 {offsets = [0, 6], sizes = [2, 384], strides = [1, 1]} : vector<2x390xf32> to vector<2x384xf32>
    %cst_55 = arith.constant 0.000000e+00 : f32
    %148 = vector.shape_cast %68 : vector<1x384xi1> to vector<1x384xi1>
    %149 = vector.broadcast %148 : vector<1x384xi1> to vector<2x384xi1>
    %150 = vector.broadcast %cst_55 : f32 to vector<2x384xf32>
    %151 = arith.select %149, %147, %150 : vector<2x384xi1>, vector<2x384xf32>
    %c12 = arith.constant 12 : index
    %c0_56 = arith.constant 0 : index
    %152 = vector.load %arg6[%c12, %c0_56] : memref<14x384xf32, #tpu.memory_space<vmem>>, vector<2x384xf32>
    tpu.vector_store %arg6[%c12, %c0_56], %151 {strides = array<i32>} : memref<14x384xf32, #tpu.memory_space<vmem>>, vector<2x384xf32>,
    %c0_57 = arith.constant 0 : index
    %c0_58 = arith.constant 0 : index
    %153 = vector.load %arg6[%c0_57, %c0_58] : memref<14x384xf32, #tpu.memory_space<vmem>>, vector<14x384xf32>
    %cst_59 = arith.constant 0.000000e+00 : f32
    %154 = vector.broadcast %cst_59 : f32 to vector<14x256xf32>
    %155 = vector.extract_strided_slice %153 {offsets = [0, 0], sizes = [14, 256], strides = [1, 1]} : vector<14x384xf32> to vector<14x256xf32>
    %156 = vector.extract_strided_slice %2 {offsets = [0, 0], sizes = [14, 1], strides = [1, 1]} : vector<14x7xf32> to vector<14x1xf32>
    %157 = vector.broadcast %156 : vector<14x1xf32> to vector<14x256xf32>
    %158 = arith.mulf %155, %157 : vector<14x256xf32>
    %159 = arith.addf %154, %158 : vector<14x256xf32>
    %160 = vector.extract_strided_slice %153 {offsets = [0, 16], sizes = [14, 256], strides = [1, 1]} : vector<14x384xf32> to vector<14x256xf32>
    %161 = vector.extract_strided_slice %2 {offsets = [0, 1], sizes = [14, 1], strides = [1, 1]} : vector<14x7xf32> to vector<14x1xf32>
    %162 = vector.broadcast %161 : vector<14x1xf32> to vector<14x256xf32>
    %163 = arith.mulf %160, %162 : vector<14x256xf32>
    %164 = arith.addf %159, %163 : vector<14x256xf32>
    %165 = vector.extract_strided_slice %153 {offsets = [0, 32], sizes = [14, 256], strides = [1, 1]} : vector<14x384xf32> to vector<14x256xf32>
    %166 = vector.extract_strided_slice %2 {offsets = [0, 2], sizes = [14, 1], strides = [1, 1]} : vector<14x7xf32> to vector<14x1xf32>
    %167 = vector.broadcast %166 : vector<14x1xf32> to vector<14x256xf32>
    %168 = arith.mulf %165, %167 : vector<14x256xf32>
    %169 = arith.addf %164, %168 : vector<14x256xf32>
    %170 = vector.extract_strided_slice %153 {offsets = [0, 48], sizes = [14, 256], strides = [1, 1]} : vector<14x384xf32> to vector<14x256xf32>
    %171 = vector.extract_strided_slice %2 {offsets = [0, 3], sizes = [14, 1], strides = [1, 1]} : vector<14x7xf32> to vector<14x1xf32>
    %172 = vector.broadcast %171 : vector<14x1xf32> to vector<14x256xf32>
    %173 = arith.mulf %170, %172 : vector<14x256xf32>
    %174 = arith.addf %169, %173 : vector<14x256xf32>
    %175 = vector.extract_strided_slice %153 {offsets = [0, 64], sizes = [14, 256], strides = [1, 1]} : vector<14x384xf32> to vector<14x256xf32>
    %176 = vector.extract_strided_slice %2 {offsets = [0, 4], sizes = [14, 1], strides = [1, 1]} : vector<14x7xf32> to vector<14x1xf32>
    %177 = vector.broadcast %176 : vector<14x1xf32> to vector<14x256xf32>
    %178 = arith.mulf %175, %177 : vector<14x256xf32>
    %179 = arith.addf %174, %178 : vector<14x256xf32>
    %180 = vector.extract_strided_slice %153 {offsets = [0, 80], sizes = [14, 256], strides = [1, 1]} : vector<14x384xf32> to vector<14x256xf32>
    %181 = vector.extract_strided_slice %2 {offsets = [0, 5], sizes = [14, 1], strides = [1, 1]} : vector<14x7xf32> to vector<14x1xf32>
    %182 = vector.broadcast %181 : vector<14x1xf32> to vector<14x256xf32>
    %183 = arith.mulf %180, %182 : vector<14x256xf32>
    %184 = arith.addf %179, %183 : vector<14x256xf32>
    %185 = vector.extract_strided_slice %153 {offsets = [0, 96], sizes = [14, 256], strides = [1, 1]} : vector<14x384xf32> to vector<14x256xf32>
    %186 = vector.extract_strided_slice %2 {offsets = [0, 6], sizes = [14, 1], strides = [1, 1]} : vector<14x7xf32> to vector<14x1xf32>
    %187 = vector.broadcast %186 : vector<14x1xf32> to vector<14x256xf32>
    %188 = arith.mulf %185, %187 : vector<14x256xf32>
    %189 = arith.addf %184, %188 : vector<14x256xf32>
    %cst_60 = arith.constant dense<0.000000e+00> : vector<256xf32>
    %190 = vector.multi_reduction <add>, %189, %cst_60 [0] : vector<14x256xf32> to vector<256xf32>
    %191 = vector.shape_cast %190 : vector<256xf32> to vector<1x256xf32>
    %192 = arith.negf %191 : vector<1x256xf32>
    %193 = math.exp %192 : vector<1x256xf32>
    %cst_61 = arith.constant 1.000000e+00 : f32
    %194 = vector.broadcast %cst_61 : f32 to vector<1x256xf32>
    %195 = arith.addf %194, %193 : vector<1x256xf32>
    %196 = arith.divf %194, %195 : vector<1x256xf32>
    %197 = vector.broadcast %196 : vector<1x256xf32> to vector<32x256xf32>
    %198 = arith.mulf %100, %197 : vector<32x256xf32>
    %c0_62 = arith.constant 0 : index
    %c0_63 = arith.constant 0 : index
    %c0_64 = arith.constant 0 : index
    %199 = vector.load %arg5[%c0_62, %c0_63, %c0_64] : memref<2x32x256xf32, #tpu.memory_space<vmem>>, vector<1x32x256xf32>
    %200 = vector.shape_cast %199 : vector<1x32x256xf32> to vector<32x256xf32>
    %201 = vector.shape_cast %198 : vector<32x256xf32> to vector<1x32x256xf32>
    tpu.vector_store %arg5[%c0_62, %c0_63, %c0_64], %201 {strides = array<i32>} : memref<2x32x256xf32, #tpu.memory_space<vmem>>, vector<1x32x256xf32>,
    %c1 = arith.constant 1 : index
    %c0_65 = arith.constant 0 : index
    %c0_66 = arith.constant 0 : index
    %202 = vector.load %arg1[%c1, %c0_65, %c0_66] : memref<2x32x256xf32, #tpu.memory_space<vmem>>, vector<1x32x256xf32>
    %203 = vector.shape_cast %202 : vector<1x32x256xf32> to vector<32x256xf32>
    %cst_67 = arith.constant dense<0.000000e+00> : vector<32xf32>
    %204 = vector.multi_reduction <add>, %203, %cst_67 [1] : vector<32x256xf32> to vector<32xf32>
    %205 = vector.shape_cast %204 : vector<32xf32> to vector<32x1xf32>
    %cst_68 = arith.constant 2.560000e+02 : f32
    %206 = vector.broadcast %cst_68 : f32 to vector<32x1xf32>
    %207 = arith.divf %205, %206 : vector<32x1xf32>
    %cst_69 = arith.constant dense<0xFF800000> : vector<32xf32>
    %208 = vector.multi_reduction <maximumf>, %203, %cst_69 [1] : vector<32x256xf32> to vector<32xf32>
    %209 = vector.shape_cast %208 : vector<32xf32> to vector<32x1xf32>
    %210 = vector.broadcast %207 : vector<32x1xf32> to vector<32x2xf32>
    %211 = arith.mulf %0, %210 : vector<32x2xf32>
    %cst_70 = arith.constant dense<0.000000e+00> : vector<2xf32>
    %212 = vector.multi_reduction <add>, %211, %cst_70 [0] : vector<32x2xf32> to vector<2xf32>
    %213 = vector.shape_cast %212 : vector<2xf32> to vector<1x2xf32>
    %cst_71 = arith.constant 0.000000e+00 : f32
    %214 = vector.broadcast %cst_71 : f32 to vector<1x2xf32>
    %215 = arith.maximumf %213, %214 : vector<1x2xf32>
    %216 = vector.broadcast %209 : vector<32x1xf32> to vector<32x2xf32>
    %217 = arith.mulf %0, %216 : vector<32x2xf32>
    %cst_72 = arith.constant dense<0.000000e+00> : vector<2xf32>
    %218 = vector.multi_reduction <add>, %217, %cst_72 [0] : vector<32x2xf32> to vector<2xf32>
    %219 = vector.shape_cast %218 : vector<2xf32> to vector<1x2xf32>
    %cst_73 = arith.constant 0.000000e+00 : f32
    %220 = vector.broadcast %cst_73 : f32 to vector<1x2xf32>
    %221 = arith.maximumf %219, %220 : vector<1x2xf32>
    %222 = arith.addf %215, %221 : vector<1x2xf32>
    %223 = vector.broadcast %222 : vector<1x2xf32> to vector<32x2xf32>
    %224 = arith.mulf %1, %223 : vector<32x2xf32>
    %cst_74 = arith.constant dense<0.000000e+00> : vector<32xf32>
    %225 = vector.multi_reduction <add>, %224, %cst_74 [1] : vector<32x2xf32> to vector<32xf32>
    %226 = vector.shape_cast %225 : vector<32xf32> to vector<32x1xf32>
    %227 = arith.negf %226 : vector<32x1xf32>
    %228 = math.exp %227 : vector<32x1xf32>
    %cst_75 = arith.constant 1.000000e+00 : f32
    %229 = vector.broadcast %cst_75 : f32 to vector<32x1xf32>
    %230 = arith.addf %229, %228 : vector<32x1xf32>
    %231 = arith.divf %229, %230 : vector<32x1xf32>
    %232 = vector.broadcast %231 : vector<32x1xf32> to vector<32x256xf32>
    %233 = arith.mulf %203, %232 : vector<32x256xf32>
    %cst_76 = arith.constant dense<0.000000e+00> : vector<256xf32>
    %234 = vector.multi_reduction <add>, %233, %cst_76 [0] : vector<32x256xf32> to vector<256xf32>
    %235 = vector.shape_cast %234 : vector<256xf32> to vector<1x256xf32>
    %cst_77 = arith.constant 3.200000e+01 : f32
    %236 = vector.broadcast %cst_77 : f32 to vector<1x256xf32>
    %237 = arith.divf %235, %236 : vector<1x256xf32>
    %cst_78 = arith.constant dense<0xFF800000> : vector<256xf32>
    %238 = vector.multi_reduction <maximumf>, %233, %cst_78 [0] : vector<32x256xf32> to vector<256xf32>
    %239 = vector.shape_cast %238 : vector<256xf32> to vector<1x256xf32>
    %240 = tpu.concatenate %237, %239 in 0 : vector<1x256xf32>, vector<1x256xf32> -> vector<2x256xf32>
    %cst_79 = arith.constant 0.000000e+00 : f32
    %241 = vector.broadcast %cst_79 : f32 to vector<2x51xf32>
    %cst_80 = arith.constant 0.000000e+00 : f32
    %242 = vector.broadcast %cst_80 : f32 to vector<2x83xf32>
    %243 = tpu.concatenate %241, %240, %242 in 1 : vector<2x51xf32>, vector<2x256xf32>, vector<2x83xf32> -> vector<2x390xf32>
    %244 = vector.extract_strided_slice %243 {offsets = [0, 0], sizes = [2, 384], strides = [1, 1]} : vector<2x390xf32> to vector<2x384xf32>
    %cst_81 = arith.constant 0.000000e+00 : f32
    %245 = vector.shape_cast %14 : vector<1x384xi1> to vector<1x384xi1>
    %246 = vector.broadcast %245 : vector<1x384xi1> to vector<2x384xi1>
    %247 = vector.broadcast %cst_81 : f32 to vector<2x384xf32>
    %248 = arith.select %246, %244, %247 : vector<2x384xi1>, vector<2x384xf32>
    %c0_82 = arith.constant 0 : index
    %c0_83 = arith.constant 0 : index
    %249 = vector.load %arg6[%c0_82, %c0_83] : memref<14x384xf32, #tpu.memory_space<vmem>>, vector<2x384xf32>
    tpu.vector_store %arg6[%c0_82, %c0_83], %248 {strides = array<i32>} : memref<14x384xf32, #tpu.memory_space<vmem>>, vector<2x384xf32>,
    %250 = vector.extract_strided_slice %243 {offsets = [0, 1], sizes = [2, 384], strides = [1, 1]} : vector<2x390xf32> to vector<2x384xf32>
    %cst_84 = arith.constant 0.000000e+00 : f32
    %251 = vector.shape_cast %23 : vector<1x384xi1> to vector<1x384xi1>
    %252 = vector.broadcast %251 : vector<1x384xi1> to vector<2x384xi1>
    %253 = vector.broadcast %cst_84 : f32 to vector<2x384xf32>
    %254 = arith.select %252, %250, %253 : vector<2x384xi1>, vector<2x384xf32>
    %c2_85 = arith.constant 2 : index
    %c0_86 = arith.constant 0 : index
    %255 = vector.load %arg6[%c2_85, %c0_86] : memref<14x384xf32, #tpu.memory_space<vmem>>, vector<2x384xf32>
    tpu.vector_store %arg6[%c2_85, %c0_86], %254 {strides = array<i32>} : memref<14x384xf32, #tpu.memory_space<vmem>>, vector<2x384xf32>,
    %256 = vector.extract_strided_slice %243 {offsets = [0, 2], sizes = [2, 384], strides = [1, 1]} : vector<2x390xf32> to vector<2x384xf32>
    %cst_87 = arith.constant 0.000000e+00 : f32
    %257 = vector.shape_cast %32 : vector<1x384xi1> to vector<1x384xi1>
    %258 = vector.broadcast %257 : vector<1x384xi1> to vector<2x384xi1>
    %259 = vector.broadcast %cst_87 : f32 to vector<2x384xf32>
    %260 = arith.select %258, %256, %259 : vector<2x384xi1>, vector<2x384xf32>
    %c4_88 = arith.constant 4 : index
    %c0_89 = arith.constant 0 : index
    %261 = vector.load %arg6[%c4_88, %c0_89] : memref<14x384xf32, #tpu.memory_space<vmem>>, vector<2x384xf32>
    tpu.vector_store %arg6[%c4_88, %c0_89], %260 {strides = array<i32>} : memref<14x384xf32, #tpu.memory_space<vmem>>, vector<2x384xf32>,
    %262 = vector.extract_strided_slice %243 {offsets = [0, 3], sizes = [2, 384], strides = [1, 1]} : vector<2x390xf32> to vector<2x384xf32>
    %cst_90 = arith.constant 0.000000e+00 : f32
    %263 = vector.shape_cast %41 : vector<1x384xi1> to vector<1x384xi1>
    %264 = vector.broadcast %263 : vector<1x384xi1> to vector<2x384xi1>
    %265 = vector.broadcast %cst_90 : f32 to vector<2x384xf32>
    %266 = arith.select %264, %262, %265 : vector<2x384xi1>, vector<2x384xf32>
    %c6_91 = arith.constant 6 : index
    %c0_92 = arith.constant 0 : index
    %267 = vector.load %arg6[%c6_91, %c0_92] : memref<14x384xf32, #tpu.memory_space<vmem>>, vector<2x384xf32>
    tpu.vector_store %arg6[%c6_91, %c0_92], %266 {strides = array<i32>} : memref<14x384xf32, #tpu.memory_space<vmem>>, vector<2x384xf32>,
    %268 = vector.extract_strided_slice %243 {offsets = [0, 4], sizes = [2, 384], strides = [1, 1]} : vector<2x390xf32> to vector<2x384xf32>
    %cst_93 = arith.constant 0.000000e+00 : f32
    %269 = vector.shape_cast %50 : vector<1x384xi1> to vector<1x384xi1>
    %270 = vector.broadcast %269 : vector<1x384xi1> to vector<2x384xi1>
    %271 = vector.broadcast %cst_93 : f32 to vector<2x384xf32>
    %272 = arith.select %270, %268, %271 : vector<2x384xi1>, vector<2x384xf32>
    %c8_94 = arith.constant 8 : index
    %c0_95 = arith.constant 0 : index
    %273 = vector.load %arg6[%c8_94, %c0_95] : memref<14x384xf32, #tpu.memory_space<vmem>>, vector<2x384xf32>
    tpu.vector_store %arg6[%c8_94, %c0_95], %272 {strides = array<i32>} : memref<14x384xf32, #tpu.memory_space<vmem>>, vector<2x384xf32>,
    %274 = vector.extract_strided_slice %243 {offsets = [0, 5], sizes = [2, 384], strides = [1, 1]} : vector<2x390xf32> to vector<2x384xf32>
    %cst_96 = arith.constant 0.000000e+00 : f32
    %275 = vector.shape_cast %59 : vector<1x384xi1> to vector<1x384xi1>
    %276 = vector.broadcast %275 : vector<1x384xi1> to vector<2x384xi1>
    %277 = vector.broadcast %cst_96 : f32 to vector<2x384xf32>
    %278 = arith.select %276, %274, %277 : vector<2x384xi1>, vector<2x384xf32>
    %c10_97 = arith.constant 10 : index
    %c0_98 = arith.constant 0 : index
    %279 = vector.load %arg6[%c10_97, %c0_98] : memref<14x384xf32, #tpu.memory_space<vmem>>, vector<2x384xf32>
    tpu.vector_store %arg6[%c10_97, %c0_98], %278 {strides = array<i32>} : memref<14x384xf32, #tpu.memory_space<vmem>>, vector<2x384xf32>,
    %280 = vector.extract_strided_slice %243 {offsets = [0, 6], sizes = [2, 384], strides = [1, 1]} : vector<2x390xf32> to vector<2x384xf32>
    %cst_99 = arith.constant 0.000000e+00 : f32
    %281 = vector.shape_cast %68 : vector<1x384xi1> to vector<1x384xi1>
    %282 = vector.broadcast %281 : vector<1x384xi1> to vector<2x384xi1>
    %283 = vector.broadcast %cst_99 : f32 to vector<2x384xf32>
    %284 = arith.select %282, %280, %283 : vector<2x384xi1>, vector<2x384xf32>
    %c12_100 = arith.constant 12 : index
    %c0_101 = arith.constant 0 : index
    %285 = vector.load %arg6[%c12_100, %c0_101] : memref<14x384xf32, #tpu.memory_space<vmem>>, vector<2x384xf32>
    tpu.vector_store %arg6[%c12_100, %c0_101], %284 {strides = array<i32>} : memref<14x384xf32, #tpu.memory_space<vmem>>, vector<2x384xf32>,
    %c0_102 = arith.constant 0 : index
    %c0_103 = arith.constant 0 : index
    %286 = vector.load %arg6[%c0_102, %c0_103] : memref<14x384xf32, #tpu.memory_space<vmem>>, vector<14x384xf32>
    %cst_104 = arith.constant 0.000000e+00 : f32
    %287 = vector.broadcast %cst_104 : f32 to vector<14x256xf32>
    %288 = vector.extract_strided_slice %286 {offsets = [0, 0], sizes = [14, 256], strides = [1, 1]} : vector<14x384xf32> to vector<14x256xf32>
    %289 = vector.extract_strided_slice %2 {offsets = [0, 0], sizes = [14, 1], strides = [1, 1]} : vector<14x7xf32> to vector<14x1xf32>
    %290 = vector.broadcast %289 : vector<14x1xf32> to vector<14x256xf32>
    %291 = arith.mulf %288, %290 : vector<14x256xf32>
    %292 = arith.addf %287, %291 : vector<14x256xf32>
    %293 = vector.extract_strided_slice %286 {offsets = [0, 16], sizes = [14, 256], strides = [1, 1]} : vector<14x384xf32> to vector<14x256xf32>
    %294 = vector.extract_strided_slice %2 {offsets = [0, 1], sizes = [14, 1], strides = [1, 1]} : vector<14x7xf32> to vector<14x1xf32>
    %295 = vector.broadcast %294 : vector<14x1xf32> to vector<14x256xf32>
    %296 = arith.mulf %293, %295 : vector<14x256xf32>
    %297 = arith.addf %292, %296 : vector<14x256xf32>
    %298 = vector.extract_strided_slice %286 {offsets = [0, 32], sizes = [14, 256], strides = [1, 1]} : vector<14x384xf32> to vector<14x256xf32>
    %299 = vector.extract_strided_slice %2 {offsets = [0, 2], sizes = [14, 1], strides = [1, 1]} : vector<14x7xf32> to vector<14x1xf32>
    %300 = vector.broadcast %299 : vector<14x1xf32> to vector<14x256xf32>
    %301 = arith.mulf %298, %300 : vector<14x256xf32>
    %302 = arith.addf %297, %301 : vector<14x256xf32>
    %303 = vector.extract_strided_slice %286 {offsets = [0, 48], sizes = [14, 256], strides = [1, 1]} : vector<14x384xf32> to vector<14x256xf32>
    %304 = vector.extract_strided_slice %2 {offsets = [0, 3], sizes = [14, 1], strides = [1, 1]} : vector<14x7xf32> to vector<14x1xf32>
    %305 = vector.broadcast %304 : vector<14x1xf32> to vector<14x256xf32>
    %306 = arith.mulf %303, %305 : vector<14x256xf32>
    %307 = arith.addf %302, %306 : vector<14x256xf32>
    %308 = vector.extract_strided_slice %286 {offsets = [0, 64], sizes = [14, 256], strides = [1, 1]} : vector<14x384xf32> to vector<14x256xf32>
    %309 = vector.extract_strided_slice %2 {offsets = [0, 4], sizes = [14, 1], strides = [1, 1]} : vector<14x7xf32> to vector<14x1xf32>
    %310 = vector.broadcast %309 : vector<14x1xf32> to vector<14x256xf32>
    %311 = arith.mulf %308, %310 : vector<14x256xf32>
    %312 = arith.addf %307, %311 : vector<14x256xf32>
    %313 = vector.extract_strided_slice %286 {offsets = [0, 80], sizes = [14, 256], strides = [1, 1]} : vector<14x384xf32> to vector<14x256xf32>
    %314 = vector.extract_strided_slice %2 {offsets = [0, 5], sizes = [14, 1], strides = [1, 1]} : vector<14x7xf32> to vector<14x1xf32>
    %315 = vector.broadcast %314 : vector<14x1xf32> to vector<14x256xf32>
    %316 = arith.mulf %313, %315 : vector<14x256xf32>
    %317 = arith.addf %312, %316 : vector<14x256xf32>
    %318 = vector.extract_strided_slice %286 {offsets = [0, 96], sizes = [14, 256], strides = [1, 1]} : vector<14x384xf32> to vector<14x256xf32>
    %319 = vector.extract_strided_slice %2 {offsets = [0, 6], sizes = [14, 1], strides = [1, 1]} : vector<14x7xf32> to vector<14x1xf32>
    %320 = vector.broadcast %319 : vector<14x1xf32> to vector<14x256xf32>
    %321 = arith.mulf %318, %320 : vector<14x256xf32>
    %322 = arith.addf %317, %321 : vector<14x256xf32>
    %cst_105 = arith.constant dense<0.000000e+00> : vector<256xf32>
    %323 = vector.multi_reduction <add>, %322, %cst_105 [0] : vector<14x256xf32> to vector<256xf32>
    %324 = vector.shape_cast %323 : vector<256xf32> to vector<1x256xf32>
    %325 = arith.negf %324 : vector<1x256xf32>
    %326 = math.exp %325 : vector<1x256xf32>
    %cst_106 = arith.constant 1.000000e+00 : f32
    %327 = vector.broadcast %cst_106 : f32 to vector<1x256xf32>
    %328 = arith.addf %327, %326 : vector<1x256xf32>
    %329 = arith.divf %327, %328 : vector<1x256xf32>
    %330 = vector.broadcast %329 : vector<1x256xf32> to vector<32x256xf32>
    %331 = arith.mulf %233, %330 : vector<32x256xf32>
    %c1_107 = arith.constant 1 : index
    %c0_108 = arith.constant 0 : index
    %c0_109 = arith.constant 0 : index
    %332 = vector.load %arg5[%c1_107, %c0_108, %c0_109] : memref<2x32x256xf32, #tpu.memory_space<vmem>>, vector<1x32x256xf32>
    %333 = vector.shape_cast %332 : vector<1x32x256xf32> to vector<32x256xf32>
    %334 = vector.shape_cast %331 : vector<32x256xf32> to vector<1x32x256xf32>
    tpu.vector_store %arg5[%c1_107, %c0_108, %c0_109], %334 {strides = array<i32>} : memref<2x32x256xf32, #tpu.memory_space<vmem>>, vector<1x32x256xf32>,
    return
  }
  func.func @transform_0(%arg0: i32) -> (i32, i32, i32) {
    %c0_i32 = arith.constant 0 : i32
    %c0_i32_0 = arith.constant 0 : i32
    %c0_i32_1 = arith.constant 0 : i32
    return %arg0, %c0_i32, %c0_i32_0 : i32, i32, i32
  }
  func.func @transform_1(%arg0: i32) -> (i32, i32) {
    %c0_i32 = arith.constant 0 : i32
    %c0_i32_0 = arith.constant 0 : i32
    %c0_i32_1 = arith.constant 0 : i32
    return %c0_i32, %c0_i32_0 : i32, i32
  }
  func.func @transform_2(%arg0: i32) -> (i32, i32) {
    %c0_i32 = arith.constant 0 : i32
    %c0_i32_0 = arith.constant 0 : i32
    %c0_i32_1 = arith.constant 0 : i32
    return %c0_i32, %c0_i32_0 : i32, i32
  }
  func.func @transform_3(%arg0: i32) -> (i32, i32) {
    %c0_i32 = arith.constant 0 : i32
    %c0_i32_0 = arith.constant 0 : i32
    %c0_i32_1 = arith.constant 0 : i32
    return %c0_i32, %c0_i32_0 : i32, i32
  }
  func.func @transform_4(%arg0: i32) -> (i32, i32, i32) {
    %c0_i32 = arith.constant 0 : i32
    %c0_i32_0 = arith.constant 0 : i32
    %c0_i32_1 = arith.constant 0 : i32
    return %arg0, %c0_i32, %c0_i32_0 : i32, i32, i32
  }
}

</mosaic_0001>

<llo_original>
// kernel: cbam_pallas.1
$region0: #{cbam_pallas.1}
  #allocation0 [shape = 'u32[]', space=smem, size = 0x4, offset = 0x4, fixed_abs, tag = 'smem constant byte address 0x4 - core index']
  #allocation1 [shape = 'u32[144,128]{1,0:T(1,128)}', space=vmem, size = 0x12000, scoped, tag = 'internal scratch']
  #allocation2 [shape = 'f32[14,384]{1,0:T(8,128)}', space=vmem, size = 0x6000, scoped, tag = 'scratch operand']
  %s0 = inlined_call_operand.vmem [shape: f32[2,32,256], index: 0, kind: input, shape index: {}]
  %s1 = inlined_call_operand.vmem [shape: f32[32,2], index: 1, kind: input, shape index: {}]
  %s2 = inlined_call_operand.vmem [shape: f32[32,2], index: 2, kind: input, shape index: {}]
  %s3 = inlined_call_operand.vmem [shape: f32[14,7], index: 3, kind: input, shape index: {}]
  %s4 = inlined_call_operand.vmem [shape: f32[2,32,256], index: 4, kind: output, shape index: {}]
  %s5 = sld [smem:[#allocation0]]
  $region26: #{cbam_pallas.1} parent=0
    _
  %s7 = ssub.s32 1, %s5
  %s8 = scalar_select 0, %s7, %s5
  // Predicated region
  $region2: #{cbam_pallas.1} parent=0 // pred_check
    _
  $region3: #{cbam_pallas.1} parent=0 // pred_check_branch
    %10 = sbr.rel (0) target = $region5
  $region4: #{cbam_pallas.1} parent=0 // pred_region
    _
  $region5: #{cbam_pallas.1} parent=0 // pred_fallthru
    _
  // Predicated region
  $region6: #{cbam_pallas.1} parent=0 // pred_check
    _
  $region7: #{cbam_pallas.1} parent=0 // pred_check_branch
    %12 = sbr.rel (0) target = $region9
  $region8: #{cbam_pallas.1} parent=0 // pred_region
    _
  $region9: #{cbam_pallas.1} parent=0 // pred_fallthru
    _
  // Predicated region
  $region10: #{cbam_pallas.1} parent=0 // pred_check
    _
  $region11: #{cbam_pallas.1} parent=0 // pred_check_branch
    %14 = sbr.rel (0) target = $region13
  $region12: #{cbam_pallas.1} parent=0 // pred_region
    _
  $region13: #{cbam_pallas.1} parent=0 // pred_fallthru
    _
  // Predicated region
  $region14: #{cbam_pallas.1} parent=0 // pred_check
    _
  $region15: #{cbam_pallas.1} parent=0 // pred_check_branch
    %16 = sbr.rel (0) target = $region17
  $region16: #{cbam_pallas.1} parent=0 // pred_region
    _
  $region17: #{cbam_pallas.1} parent=0 // pred_fallthru
    _
  %v17 = vld [vmem:[%s1] sm:$0xff]
  %v18 = vld [vmem:[%s1 + $0x8] sm:$0xff]
  %v19 = vld [vmem:[%s1 + $0x10] sm:$0xff]
  %v20 = vld [vmem:[%s1 + $0x18] sm:$0xff]
  %v21 = vld [vmem:[%s2] sm:$0xff]
  %v22 = vld [vmem:[%s2 + $0x8] sm:$0xff]
  %v23 = vld [vmem:[%s2 + $0x10] sm:$0xff]
  %v24 = vld [vmem:[%s2 + $0x18] sm:$0xff]
  %v25 = vld [vmem:[%s3] sm:$0xff]
  %v26 = vld [vmem:[%s3 + $0x8] sm:$0x3f]
  %v27 = vlaneseq
  %v28 = vand.u32 %v27, 127
  %v29 = vadd.s32 %v28, 128
  %v30 = vadd.s32 %v28, 256
  %v31 = vand.u32 %v28, 15
  %v32 = vand.u32 %v29, 15
  %v33 = vand.u32 %v30, 15
  %v34 = vadd.s32 %v31, 4294967293
  %v35 = vadd.s32 %v32, 4294967293
  %v36 = vadd.s32 %v33, 4294967293
  %vm37 = vcmp.ge.s32.totalorder %v34, 0
  %vm38 = vcmp.ge.s32.totalorder %v35, 0
  %vm39 = vcmp.ge.s32.totalorder %v36, 0
  %vm40 = vcmp.le.s32.totalorder %v34, 15
  %vm41 = vcmp.le.s32.totalorder %v35, 15
  %vm42 = vcmp.le.s32.totalorder %v36, 15
  %vm43 = vmand %vm37, %vm40
  %vm44 = vmand %vm38, %vm41
  %vm45 = vmand %vm39, %vm42
  %v46 = vadd.s32 %v31, 4294967294
  %v47 = vadd.s32 %v32, 4294967294
  %v48 = vadd.s32 %v33, 4294967294
  %vm49 = vcmp.ge.s32.totalorder %v46, 0
  %vm50 = vcmp.ge.s32.totalorder %v47, 0
  %vm51 = vcmp.ge.s32.totalorder %v48, 0
  %vm52 = vcmp.le.s32.totalorder %v46, 15
  %vm53 = vcmp.le.s32.totalorder %v47, 15
  %vm54 = vcmp.le.s32.totalorder %v48, 15
  %vm55 = vmand %vm49, %vm52
  %vm56 = vmand %vm50, %vm53
  %vm57 = vmand %vm51, %vm54
  %v58 = vadd.s32 %v31, 4294967295
  %v59 = vadd.s32 %v32, 4294967295
  %v60 = vadd.s32 %v33, 4294967295
  %vm61 = vcmp.ge.s32.totalorder %v58, 0
  %vm62 = vcmp.ge.s32.totalorder %v59, 0
  %vm63 = vcmp.ge.s32.totalorder %v60, 0
  %vm64 = vcmp.le.s32.totalorder %v58, 15
  %vm65 = vcmp.le.s32.totalorder %v59, 15
  %vm66 = vcmp.le.s32.totalorder %v60, 15
  %vm67 = vmand %vm61, %vm64
  %vm68 = vmand %vm62, %vm65
  %vm69 = vmand %vm63, %vm66
  %vm70 = vcmp.ge.s32.totalorder %v31, 0
  %vm71 = vcmp.ge.s32.totalorder %v32, 0
  %vm72 = vcmp.ge.s32.totalorder %v33, 0
  %vm73 = vcmp.le.s32.totalorder %v31, 15
  %vm74 = vcmp.le.s32.totalorder %v32, 15
  %vm75 = vcmp.le.s32.totalorder %v33, 15
  %vm76 = vmand %vm70, %vm73
  %vm77 = vmand %vm71, %vm74
  %vm78 = vmand %vm72, %vm75
  %v79 = vadd.s32 %v31, 1
  %v80 = vadd.s32 %v32, 1
  %v81 = vadd.s32 %v33, 1
  %vm82 = vcmp.ge.s32.totalorder %v79, 0
  %vm83 = vcmp.ge.s32.totalorder %v80, 0
  %vm84 = vcmp.ge.s32.totalorder %v81, 0
  %vm85 = vcmp.le.s32.totalorder %v79, 15
  %vm86 = vcmp.le.s32.totalorder %v80, 15
  %vm87 = vcmp.le.s32.totalorder %v81, 15
  %vm88 = vmand %vm82, %vm85
  %vm89 = vmand %vm83, %vm86
  %vm90 = vmand %vm84, %vm87
  %v91 = vadd.s32 %v31, 2
  %v92 = vadd.s32 %v32, 2
  %v93 = vadd.s32 %v33, 2
  %vm94 = vcmp.ge.s32.totalorder %v91, 0
  %vm95 = vcmp.ge.s32.totalorder %v92, 0
  %vm96 = vcmp.ge.s32.totalorder %v93, 0
  %vm97 = vcmp.le.s32.totalorder %v91, 15
  %vm98 = vcmp.le.s32.totalorder %v92, 15
  %vm99 = vcmp.le.s32.totalorder %v93, 15
  %vm100 = vmand %vm94, %vm97
  %vm101 = vmand %vm95, %vm98
  %vm102 = vmand %vm96, %vm99
  %v103 = vadd.s32 %v31, 3
  %v104 = vadd.s32 %v32, 3
  %v105 = vadd.s32 %v33, 3
  %vm106 = vcmp.ge.s32.totalorder %v103, 0
  %vm107 = vcmp.ge.s32.totalorder %v104, 0
  %vm108 = vcmp.ge.s32.totalorder %v105, 0
  %vm109 = vcmp.le.s32.totalorder %v103, 15
  %vm110 = vcmp.le.s32.totalorder %v104, 15
  %vm111 = vcmp.le.s32.totalorder %v105, 15
  %vm112 = vmand %vm106, %vm109
  %vm113 = vmand %vm107, %vm110
  %vm114 = vmand %vm108, %vm111
  %v115 = vld [vmem:[%s0] sm:$0xff]
  %v116 = vld [vmem:[%s0 + $0x8] sm:$0xff]
  %v117 = vld [vmem:[%s0 + $0x10] sm:$0xff]
  %v118 = vld [vmem:[%s0 + $0x18] sm:$0xff]
  %v119 = vld [vmem:[%s0 + $0x20] sm:$0xff]
  %v120 = vld [vmem:[%s0 + $0x28] sm:$0xff]
  %v121 = vld [vmem:[%s0 + $0x30] sm:$0xff]
  %v122 = vld [vmem:[%s0 + $0x38] sm:$0xff]
  %v123 = vadd.f32 %v115, %v116
  %124 = vadd.xlane.f32.xlu0 %v123
  %v125 = vpop.xlane.xlu0 %124
  %v126 = vadd.f32 %v117, %v118
  %127 = vadd.xlane.f32.xlu0 %v126
  %v128 = vpop.xlane.xlu0 %127
  %v129 = vadd.f32 %v119, %v120
  %130 = vadd.xlane.f32.xlu0 %v129
  %v131 = vpop.xlane.xlu0 %130
  %v132 = vadd.f32 %v121, %v122
  %133 = vadd.xlane.f32.xlu0 %v132
  %v134 = vpop.xlane.xlu0 %133
  %v135 = vrcp.pop 256.0
  %v136 = vmul.f32 %v125, %v135
  %v137 = vmul.f32 %v128, %v135
  %v138 = vmul.f32 %v131, %v135
  %v139 = vmul.f32 %v134, %v135
  %v140 = vmax.f32 %v115, %v116
  %141 = vmax.xlane.f32.xlu0 %v140
  %v142 = vpop.xlane.xlu0 %141
  %v143 = vmax.f32 %v117, %v118
  %144 = vmax.xlane.f32.xlu0 %v143
  %v145 = vpop.xlane.xlu0 %144
  %v146 = vmax.f32 %v119, %v120
  %147 = vmax.xlane.f32.xlu0 %v146
  %v148 = vpop.xlane.xlu0 %147
  %v149 = vmax.f32 %v121, %v122
  %150 = vmax.xlane.f32.xlu0 %v149
  %v151 = vpop.xlane.xlu0 %150
  %v152 = vmul.f32 %v17, %v136
  %v153 = vmul.f32 %v18, %v137
  %v154 = vmul.f32 %v19, %v138
  %v155 = vmul.f32 %v20, %v139
  %vm156 = vcmask 15360
  %v157 = vsel %vm156, %v152, 0.0
  %v158 = vsel %vm156, %v153, 0.0
  %v159 = vadd.f32 %v157, %v158
  %v160 = vsel %vm156, %v154, 0.0
  %v161 = vadd.f32 %v159, %v160
  %v162 = vsel %vm156, %v155, 0.0
  %v163 = vadd.f32 %v161, %v162
  %v164 = vrot.slane %v163, 4
  %v165 = vadd.f32 %v163, %v164
  %v166 = vrot.slane %v165, 2
  %v167 = vadd.f32 %v165, %v166
  %v168 = vrot.slane %v167, 1
  %v169 = vadd.f32 %v167, %v168
  %v170 = vmax.f32 %v169, 0.0
  %v171 = vmul.f32 %v17, %v142
  %v172 = vmul.f32 %v18, %v145
  %v173 = vmul.f32 %v19, %v148
  %v174 = vmul.f32 %v20, %v151
  %v175 = vsel %vm156, %v171, 0.0
  %v176 = vsel %vm156, %v172, 0.0
  %v177 = vadd.f32 %v175, %v176
  %v178 = vsel %vm156, %v173, 0.0
  %v179 = vadd.f32 %v177, %v178
  %v180 = vsel %vm156, %v174, 0.0
  %v181 = vadd.f32 %v179, %v180
  %v182 = vrot.slane %v181, 4
  %v183 = vadd.f32 %v181, %v182
  %v184 = vrot.slane %v183, 2
  %v185 = vadd.f32 %v183, %v184
  %v186 = vrot.slane %v185, 1
  %v187 = vadd.f32 %v185, %v186
  %v188 = vmax.f32 %v187, 0.0
  %v189 = vadd.f32 %v170, %v188
  %v190 = vmul.f32 %v21, %v189
  %v191 = vmul.f32 %v22, %v189
  %v192 = vmul.f32 %v23, %v189
  %v193 = vmul.f32 %v24, %v189
  %v194 = vsel %vm156, %v190, 0.0
  %195 = vadd.xlane.f32.xlu0 %v194
  %v196 = vpop.xlane.xlu0 %195
  %v197 = vsel %vm156, %v191, 0.0
  %198 = vadd.xlane.f32.xlu0 %v197
  %v199 = vpop.xlane.xlu0 %198
  %v200 = vsel %vm156, %v192, 0.0
  %201 = vadd.xlane.f32.xlu0 %v200
  %v202 = vpop.xlane.xlu0 %201
  %v203 = vsel %vm156, %v193, 0.0
  %204 = vadd.xlane.f32.xlu0 %v203
  %v205 = vpop.xlane.xlu0 %204
  %v206 = vxor.u32 %v196, 2147483648
  %v207 = vxor.u32 %v199, 2147483648
  %v208 = vxor.u32 %v202, 2147483648
  %v209 = vxor.u32 %v205, 2147483648
  %v210 = vmul.f32 %v206, 1.442695
  %v211 = vpow.pop %v210
  %v212 = vmul.f32 %v207, 1.442695
  %v213 = vpow.pop %v212
  %v214 = vmul.f32 %v208, 1.442695
  %v215 = vpow.pop %v214
  %v216 = vmul.f32 %v209, 1.442695
  %v217 = vpow.pop %v216
  %v218 = vadd.f32 %v211, 1.0
  %v219 = vadd.f32 %v213, 1.0
  %v220 = vadd.f32 %v215, 1.0
  %v221 = vadd.f32 %v217, 1.0
  %v222 = vrcp.pop %v218
  %v223 = vmul.f32 1.0, %v222
  %v224 = vrcp.pop %v219
  %v225 = vmul.f32 1.0, %v224
  %v226 = vrcp.pop %v220
  %v227 = vmul.f32 1.0, %v226
  %v228 = vrcp.pop %v221
  %v229 = vmul.f32 1.0, %v228
  %v230 = vmul.f32 %v115, %v223
  %v231 = vmul.f32 %v116, %v223
  %v232 = vmul.f32 %v117, %v225
  %v233 = vmul.f32 %v118, %v225
  %v234 = vmul.f32 %v119, %v227
  %v235 = vmul.f32 %v120, %v227
  %v236 = vmul.f32 %v121, %v229
  %v237 = vmul.f32 %v122, %v229
  %v238 = vadd.f32 %v230, %v232
  %v239 = vadd.f32 %v238, %v234
  %v240 = vadd.f32 %v239, %v236
  %v241 = vrot.slane %v240, 4
  %v242 = vadd.f32 %v240, %v241
  %v243 = vrot.slane %v242, 2
  %v244 = vadd.f32 %v242, %v243
  %v245 = vrot.slane %v244, 1
  %v246 = vadd.f32 %v244, %v245
  %v247 = vadd.f32 %v231, %v233
  %v248 = vadd.f32 %v247, %v235
  %v249 = vadd.f32 %v248, %v237
  %v250 = vrot.slane %v249, 4
  %v251 = vadd.f32 %v249, %v250
  %v252 = vrot.slane %v251, 2
  %v253 = vadd.f32 %v251, %v252
  %v254 = vrot.slane %v253, 1
  %v255 = vadd.f32 %v253, %v254
  %v256 = vrcp.pop 32.0
  %v257 = vmul.f32 %v246, %v256
  %v258 = vmul.f32 %v255, %v256
  %v259 = vmax.f32 %v230, %v234
  %v260 = vmax.f32 %v232, %v236
  %v261 = vmax.f32 %v259, %v260
  %v262 = vrot.slane %v261, 4
  %v263 = vmax.f32 %v261, %v262
  %v264 = vrot.slane %v263, 2
  %v265 = vmax.f32 %v263, %v264
  %v266 = vrot.slane %v265, 1
  %v267 = vmax.f32 %v265, %v266
  %v268 = vmax.f32 %v231, %v235
  %v269 = vmax.f32 %v233, %v237
  %v270 = vmax.f32 %v268, %v269
  %v271 = vrot.slane %v270, 4
  %v272 = vmax.f32 %v270, %v271
  %v273 = vrot.slane %v272, 2
  %v274 = vmax.f32 %v272, %v273
  %v275 = vrot.slane %v274, 1
  %v276 = vmax.f32 %v274, %v275
  %vm277 = vcmask 1040384
  %v278 = vsel %vm277, %v257, %v267
  %v279 = vsel %vm277, %v258, %v276
  %282 = vrot.lane.b32.xlu0 %v278, 51
  %v283 = vpop.permute.xlu0 %282
  %284 = vrot.lane.b32.xlu0 %v279, 51
  %v285 = vpop.permute.xlu0 %284
  %vm286 = vcmask 416768
  %v287 = vsel %vm286, %v283, %v285
  %v291 = vsel %vm286, 0.0, %v283
  %v292 = vsel %vm286, %v285, 0.0
  %v293 = vsel %vm43, 1, 0
  %v294 = vsel %vm44, 1, 0
  %v295 = vsel %vm45, 1, 0
  %vm296 = vcmp.eq.s32.totalorder %v293, 1
  %vm297 = vcmp.eq.s32.totalorder %v294, 1
  %vm298 = vcmp.eq.s32.totalorder %v295, 1
  %v299 = vsel %vm296, %v291, 0.0
  %v300 = vsel %vm297, %v287, 0.0
  %v301 = vsel %vm298, %v292, 0.0
  %302 = vst [vmem:[#allocation2] sm:$0x3] %v299
  %303 = vst [vmem:[#allocation2 + $0x8] sm:$0x3] %v300
  %304 = vst [vmem:[#allocation2 + $0x10] sm:$0x3] %v301
  %v305 = vsel %vm55, 1, 0
  %v306 = vsel %vm56, 1, 0
  %v307 = vsel %vm57, 1, 0
  %vm308 = vcmp.eq.s32.totalorder %v305, 1
  %vm309 = vcmp.eq.s32.totalorder %v306, 1
  %vm310 = vcmp.eq.s32.totalorder %v307, 1
  %314 = vrot.lane.b32.xlu0 %v291, 127
  %v315 = vpop.permute.xlu0 %314
  %316 = vrot.lane.b32.xlu0 %v287, 127
  %v317 = vpop.permute.xlu0 %316
  %318 = vrot.lane.b32.xlu0 %v292, 127
  %v319 = vpop.permute.xlu0 %318
  %320 = vrot.lane.b32.xlu0 0.0, 127
  %v321 = vpop.permute.xlu0 %320
  %vm322 = vcmask 1039360
  %v323 = vsel %vm322, %v315, %v317
  %v324 = vsel %vm322, %v317, %v319
  %v325 = vsel %vm322, %v319, %v321
  %v329 = vsel %vm308, %v323, 0.0
  %v330 = vsel %vm309, %v324, 0.0
  %v331 = vsel %vm310, %v325, 0.0
  %v335 = vrot.slane %v329, 6
  %v336 = vrot.slane %v330, 6
  %v337 = vrot.slane %v331, 6
  %341 = vst [vmem:[#allocation2] sm:$0xc] %v335
  %342 = vst [vmem:[#allocation2 + $0x8] sm:$0xc] %v336
  %343 = vst [vmem:[#allocation2 + $0x10] sm:$0xc] %v337
  %v344 = vsel %vm67, 1, 0
  %v345 = vsel %vm68, 1, 0
  %v346 = vsel %vm69, 1, 0
  %vm347 = vcmp.eq.s32.totalorder %v344, 1
  %vm348 = vcmp.eq.s32.totalorder %v345, 1
  %vm349 = vcmp.eq.s32.totalorder %v346, 1
  %350 = vrot.lane.b32.xlu0 %v291, 126
  %v351 = vpop.permute.xlu0 %350
  %352 = vrot.lane.b32.xlu0 %v287, 126
  %v353 = vpop.permute.xlu0 %352
  %354 = vrot.lane.b32.xlu0 %v292, 126
  %v355 = vpop.permute.xlu0 %354
  %356 = vrot.lane.b32.xlu0 0.0, 126
  %v357 = vpop.permute.xlu0 %356
  %vm358 = vcmask 1031168
  %v359 = vsel %vm358, %v351, %v353
  %v360 = vsel %vm358, %v353, %v355
  %v361 = vsel %vm358, %v355, %v357
  %v365 = vsel %vm347, %v359, 0.0
  %v366 = vsel %vm348, %v360, 0.0
  %v367 = vsel %vm349, %v361, 0.0
  %v371 = vrot.slane %v365, 4
  %v372 = vrot.slane %v366, 4
  %v373 = vrot.slane %v367, 4
  %377 = vst [vmem:[#allocation2] sm:$0x30] %v371
  %378 = vst [vmem:[#allocation2 + $0x8] sm:$0x30] %v372
  %379 = vst [vmem:[#allocation2 + $0x10] sm:$0x30] %v373
  %v380 = vsel %vm76, 1, 0
  %v381 = vsel %vm77, 1, 0
  %v382 = vsel %vm78, 1, 0
  %vm383 = vcmp.eq.s32.totalorder %v380, 1
  %vm384 = vcmp.eq.s32.totalorder %v381, 1
  %vm385 = vcmp.eq.s32.totalorder %v382, 1
  %386 = vrot.lane.b32.xlu0 %v291, 125
  %v387 = vpop.permute.xlu0 %386
  %388 = vrot.lane.b32.xlu0 %v287, 125
  %v389 = vpop.permute.xlu0 %388
  %390 = vrot.lane.b32.xlu0 %v292, 125
  %v391 = vpop.permute.xlu0 %390
  %392 = vrot.lane.b32.xlu0 0.0, 125
  %v393 = vpop.permute.xlu0 %392
  %vm394 = vcmask 1022976
  %v395 = vsel %vm394, %v387, %v389
  %v396 = vsel %vm394, %v389, %v391
  %v397 = vsel %vm394, %v391, %v393
  %v401 = vsel %vm383, %v395, 0.0
  %v402 = vsel %vm384, %v396, 0.0
  %v403 = vsel %vm385, %v397, 0.0
  %v407 = vrot.slane %v401, 2
  %v408 = vrot.slane %v402, 2
  %v409 = vrot.slane %v403, 2
  %413 = vst [vmem:[#allocation2] sm:$0xc0] %v407
  %414 = vst [vmem:[#allocation2 + $0x8] sm:$0xc0] %v408
  %415 = vst [vmem:[#allocation2 + $0x10] sm:$0xc0] %v409
  %v416 = vsel %vm88, 1, 0
  %v417 = vsel %vm89, 1, 0
  %v418 = vsel %vm90, 1, 0
  %vm419 = vcmp.eq.s32.totalorder %v416, 1
  %vm420 = vcmp.eq.s32.totalorder %v417, 1
  %vm421 = vcmp.eq.s32.totalorder %v418, 1
  %422 = vrot.lane.b32.xlu0 %v291, 124
  %v423 = vpop.permute.xlu0 %422
  %424 = vrot.lane.b32.xlu0 %v287, 124
  %v425 = vpop.permute.xlu0 %424
  %426 = vrot.lane.b32.xlu0 %v292, 124
  %v427 = vpop.permute.xlu0 %426
  %428 = vrot.lane.b32.xlu0 0.0, 124
  %v429 = vpop.permute.xlu0 %428
  %vm430 = vcmask 1014784
  %v431 = vsel %vm430, %v423, %v425
  %v432 = vsel %vm430, %v425, %v427
  %v433 = vsel %vm430, %v427, %v429
  %v437 = vsel %vm419, %v431, 0.0
  %v438 = vsel %vm420, %v432, 0.0
  %v439 = vsel %vm421, %v433, 0.0
  %440 = vst [vmem:[#allocation2 + $0x18] sm:$0x3] %v437
  %441 = vst [vmem:[#allocation2 + $0x20] sm:$0x3] %v438
  %442 = vst [vmem:[#allocation2 + $0x28] sm:$0x3] %v439
  %v443 = vsel %vm100, 1, 0
  %v444 = vsel %vm101, 1, 0
  %v445 = vsel %vm102, 1, 0
  %vm446 = vcmp.eq.s32.totalorder %v443, 1
  %vm447 = vcmp.eq.s32.totalorder %v444, 1
  %vm448 = vcmp.eq.s32.totalorder %v445, 1
  %449 = vrot.lane.b32.xlu0 %v291, 123
  %v450 = vpop.permute.xlu0 %449
  %451 = vrot.lane.b32.xlu0 %v287, 123
  %v452 = vpop.permute.xlu0 %451
  %453 = vrot.lane.b32.xlu0 %v292, 123
  %v454 = vpop.permute.xlu0 %453
  %455 = vrot.lane.b32.xlu0 0.0, 123
  %v456 = vpop.permute.xlu0 %455
  %vm457 = vcmask 1006592
  %v458 = vsel %vm457, %v450, %v452
  %v459 = vsel %vm457, %v452, %v454
  %v460 = vsel %vm457, %v454, %v456
  %v464 = vsel %vm446, %v458, 0.0
  %v465 = vsel %vm447, %v459, 0.0
  %v466 = vsel %vm448, %v460, 0.0
  %v470 = vrot.slane %v464, 6
  %v471 = vrot.slane %v465, 6
  %v472 = vrot.slane %v466, 6
  %476 = vst [vmem:[#allocation2 + $0x18] sm:$0xc] %v470
  %477 = vst [vmem:[#allocation2 + $0x20] sm:$0xc] %v471
  %478 = vst [vmem:[#allocation2 + $0x28] sm:$0xc] %v472
  %v479 = vsel %vm112, 1, 0
  %v480 = vsel %vm113, 1, 0
  %v481 = vsel %vm114, 1, 0
  %vm482 = vcmp.eq.s32.totalorder %v479, 1
  %vm483 = vcmp.eq.s32.totalorder %v480, 1
  %vm484 = vcmp.eq.s32.totalorder %v481, 1
  %485 = vrot.lane.b32.xlu0 %v291, 122
  %v486 = vpop.permute.xlu0 %485
  %487 = vrot.lane.b32.xlu0 %v287, 122
  %v488 = vpop.permute.xlu0 %487
  %489 = vrot.lane.b32.xlu0 %v292, 122
  %v490 = vpop.permute.xlu0 %489
  %491 = vrot.lane.b32.xlu0 0.0, 122
  %v492 = vpop.permute.xlu0 %491
  %vm493 = vcmask 998400
  %v494 = vsel %vm493, %v486, %v488
  %v495 = vsel %vm493, %v488, %v490
  %v496 = vsel %vm493, %v490, %v492
  %v500 = vsel %vm482, %v494, 0.0
  %v501 = vsel %vm483, %v495, 0.0
  %v502 = vsel %vm484, %v496, 0.0
  %v506 = vrot.slane %v500, 4
  %v507 = vrot.slane %v501, 4
  %v508 = vrot.slane %v502, 4
  %512 = vst [vmem:[#allocation2 + $0x18] sm:$0x30] %v506
  %513 = vst [vmem:[#allocation2 + $0x20] sm:$0x30] %v507
  %514 = vst [vmem:[#allocation2 + $0x28] sm:$0x30] %v508
  %v515 = vld [vmem:[#allocation2] sm:$0xff]
  %v516 = vld [vmem:[#allocation2 + $0x8] sm:$0xff]
  %v517 = vld [vmem:[#allocation2 + $0x10] sm:$0xff]
  %v518 = vld [vmem:[#allocation2 + $0x18] sm:$0x3f]
  %v519 = vld [vmem:[#allocation2 + $0x20] sm:$0x3f]
  %v520 = vld [vmem:[#allocation2 + $0x28] sm:$0x3f]
  %522 = vset.pattern.permute.xlu0 0
  %523 = vperm.xlu0 %522, %v25
  %v524 = vpop.permute.xlu0 %523
  %527 = vset.pattern.permute.xlu0 0
  %528 = vperm.xlu0 %527, %v26
  %v529 = vpop.permute.xlu0 %528
  %v531 = vmul.f32 %v515, %v524
  %v532 = vmul.f32 %v516, %v524
  %v533 = vmul.f32 %v518, %v529
  %v534 = vmul.f32 %v519, %v529
  %v535 = vadd.f32 %v531, 0.0
  %v536 = vadd.f32 %v532, 0.0
  %v537 = vadd.f32 %v533, 0.0
  %v538 = vadd.f32 %v534, 0.0
  %539 = vset.pattern.permute.xlu0 1
  %540 = vperm.xlu0 %539, %v25
  %v541 = vpop.permute.xlu0 %540
  %543 = vset.pattern.permute.xlu0 1
  %544 = vperm.xlu0 %543, %v26
  %v545 = vpop.permute.xlu0 %544
  %v547 = vmul.f32 %v515, %v541
  %v548 = vmul.f32 %v516, %v541
  %v549 = vmul.f32 %v517, %v541
  %v550 = vmul.f32 %v518, %v545
  %v551 = vmul.f32 %v519, %v545
  %v552 = vmul.f32 %v520, %v545
  %559 = vrot.lane.b32.xlu0 %v547, 112
  %v560 = vpop.permute.xlu0 %559
  %561 = vrot.lane.b32.xlu0 %v548, 112
  %v562 = vpop.permute.xlu0 %561
  %563 = vrot.lane.b32.xlu0 %v549, 112
  %v564 = vpop.permute.xlu0 %563
  %565 = vrot.lane.b32.xlu0 %v550, 112
  %v566 = vpop.permute.xlu0 %565
  %567 = vrot.lane.b32.xlu0 %v551, 112
  %v568 = vpop.permute.xlu0 %567
  %569 = vrot.lane.b32.xlu0 %v552, 112
  %v570 = vpop.permute.xlu0 %569
  %vm571 = vcmask 916480
  %v572 = vsel %vm571, %v560, %v562
  %v573 = vsel %vm571, %v562, %v564
  %v574 = vsel %vm571, %v566, %v568
  %v575 = vsel %vm571, %v568, %v570
  %v580 = vadd.f32 %v535, %v572
  %v581 = vadd.f32 %v536, %v573
  %v582 = vadd.f32 %v537, %v574
  %v583 = vadd.f32 %v538, %v575
  %584 = vset.pattern.permute.xlu0 2
  %585 = vperm.xlu0 %584, %v25
  %v586 = vpop.permute.xlu0 %585
  %588 = vset.pattern.permute.xlu0 2
  %589 = vperm.xlu0 %588, %v26
  %v590 = vpop.permute.xlu0 %589
  %v592 = vmul.f32 %v515, %v586
  %v593 = vmul.f32 %v516, %v586
  %v594 = vmul.f32 %v517, %v586
  %v595 = vmul.f32 %v518, %v590
  %v596 = vmul.f32 %v519, %v590
  %v597 = vmul.f32 %v520, %v590
  %604 = vrot.lane.b32.xlu0 %v592, 96
  %v605 = vpop.permute.xlu0 %604
  %606 = vrot.lane.b32.xlu0 %v593, 96
  %v607 = vpop.permute.xlu0 %606
  %608 = vrot.lane.b32.xlu0 %v594, 96
  %v609 = vpop.permute.xlu0 %608
  %610 = vrot.lane.b32.xlu0 %v595, 96
  %v611 = vpop.permute.xlu0 %610
  %612 = vrot.lane.b32.xlu0 %v596, 96
  %v613 = vpop.permute.xlu0 %612
  %614 = vrot.lane.b32.xlu0 %v597, 96
  %v615 = vpop.permute.xlu0 %614
  %vm616 = vcmask 785408
  %v617 = vsel %vm616, %v605, %v607
  %v618 = vsel %vm616, %v607, %v609
  %v619 = vsel %vm616, %v611, %v613
  %v620 = vsel %vm616, %v613, %v615
  %v625 = vadd.f32 %v580, %v617
  %v626 = vadd.f32 %v581, %v618
  %v627 = vadd.f32 %v582, %v619
  %v628 = vadd.f32 %v583, %v620
  %629 = vset.pattern.permute.xlu0 3
  %630 = vperm.xlu0 %629, %v25
  %v631 = vpop.permute.xlu0 %630
  %633 = vset.pattern.permute.xlu0 3
  %634 = vperm.xlu0 %633, %v26
  %v635 = vpop.permute.xlu0 %634
  %v637 = vmul.f32 %v515, %v631
  %v638 = vmul.f32 %v516, %v631
  %v639 = vmul.f32 %v517, %v631
  %v640 = vmul.f32 %v518, %v635
  %v641 = vmul.f32 %v519, %v635
  %v642 = vmul.f32 %v520, %v635
  %649 = vrot.lane.b32.xlu0 %v637, 80
  %v650 = vpop.permute.xlu0 %649
  %651 = vrot.lane.b32.xlu0 %v638, 80
  %v652 = vpop.permute.xlu0 %651
  %653 = vrot.lane.b32.xlu0 %v639, 80
  %v654 = vpop.permute.xlu0 %653
  %655 = vrot.lane.b32.xlu0 %v640, 80
  %v656 = vpop.permute.xlu0 %655
  %657 = vrot.lane.b32.xlu0 %v641, 80
  %v658 = vpop.permute.xlu0 %657
  %659 = vrot.lane.b32.xlu0 %v642, 80
  %v660 = vpop.permute.xlu0 %659
  %vm661 = vcmask 654336
  %v662 = vsel %vm661, %v650, %v652
  %v663 = vsel %vm661, %v652, %v654
  %v664 = vsel %vm661, %v656, %v658
  %v665 = vsel %vm661, %v658, %v660
  %v670 = vadd.f32 %v625, %v662
  %v671 = vadd.f32 %v626, %v663
  %v672 = vadd.f32 %v627, %v664
  %v673 = vadd.f32 %v628, %v665
  %674 = vset.pattern.permute.xlu0 4
  %675 = vperm.xlu0 %674, %v25
  %v676 = vpop.permute.xlu0 %675
  %678 = vset.pattern.permute.xlu0 4
  %679 = vperm.xlu0 %678, %v26
  %v680 = vpop.permute.xlu0 %679
  %v682 = vmul.f32 %v515, %v676
  %v683 = vmul.f32 %v516, %v676
  %v684 = vmul.f32 %v517, %v676
  %v685 = vmul.f32 %v518, %v680
  %v686 = vmul.f32 %v519, %v680
  %v687 = vmul.f32 %v520, %v680
  %694 = vrot.lane.b32.xlu0 %v682, 64
  %v695 = vpop.permute.xlu0 %694
  %696 = vrot.lane.b32.xlu0 %v683, 64
  %v697 = vpop.permute.xlu0 %696
  %698 = vrot.lane.b32.xlu0 %v684, 64
  %v699 = vpop.permute.xlu0 %698
  %700 = vrot.lane.b32.xlu0 %v685, 64
  %v701 = vpop.permute.xlu0 %700
  %702 = vrot.lane.b32.xlu0 %v686, 64
  %v703 = vpop.permute.xlu0 %702
  %704 = vrot.lane.b32.xlu0 %v687, 64
  %v705 = vpop.permute.xlu0 %704
  %vm706 = vcmask 523264
  %v707 = vsel %vm706, %v695, %v697
  %v708 = vsel %vm706, %v697, %v699
  %v709 = vsel %vm706, %v701, %v703
  %v710 = vsel %vm706, %v703, %v705
  %v715 = vadd.f32 %v670, %v707
  %v716 = vadd.f32 %v671, %v708
  %v717 = vadd.f32 %v672, %v709
  %v718 = vadd.f32 %v673, %v710
  %719 = vset.pattern.permute.xlu0 5
  %720 = vperm.xlu0 %719, %v25
  %v721 = vpop.permute.xlu0 %720
  %723 = vset.pattern.permute.xlu0 5
  %724 = vperm.xlu0 %723, %v26
  %v725 = vpop.permute.xlu0 %724
  %v727 = vmul.f32 %v515, %v721
  %v728 = vmul.f32 %v516, %v721
  %v729 = vmul.f32 %v517, %v721
  %v730 = vmul.f32 %v518, %v725
  %v731 = vmul.f32 %v519, %v725
  %v732 = vmul.f32 %v520, %v725
  %739 = vrot.lane.b32.xlu0 %v727, 48
  %v740 = vpop.permute.xlu0 %739
  %741 = vrot.lane.b32.xlu0 %v728, 48
  %v742 = vpop.permute.xlu0 %741
  %743 = vrot.lane.b32.xlu0 %v729, 48
  %v744 = vpop.permute.xlu0 %743
  %745 = vrot.lane.b32.xlu0 %v730, 48
  %v746 = vpop.permute.xlu0 %745
  %747 = vrot.lane.b32.xlu0 %v731, 48
  %v748 = vpop.permute.xlu0 %747
  %749 = vrot.lane.b32.xlu0 %v732, 48
  %v750 = vpop.permute.xlu0 %749
  %vm751 = vcmask 392192
  %v752 = vsel %vm751, %v740, %v742
  %v753 = vsel %vm751, %v742, %v744
  %v754 = vsel %vm751, %v746, %v748
  %v755 = vsel %vm751, %v748, %v750
  %v760 = vadd.f32 %v715, %v752
  %v761 = vadd.f32 %v716, %v753
  %v762 = vadd.f32 %v717, %v754
  %v763 = vadd.f32 %v718, %v755
  %764 = vset.pattern.permute.xlu0 6
  %765 = vperm.xlu0 %764, %v25
  %v766 = vpop.permute.xlu0 %765
  %768 = vset.pattern.permute.xlu0 6
  %769 = vperm.xlu0 %768, %v26
  %v770 = vpop.permute.xlu0 %769
  %v772 = vmul.f32 %v515, %v766
  %v773 = vmul.f32 %v516, %v766
  %v774 = vmul.f32 %v517, %v766
  %v775 = vmul.f32 %v518, %v770
  %v776 = vmul.f32 %v519, %v770
  %v777 = vmul.f32 %v520, %v770
  %784 = vrot.lane.b32.xlu0 %v772, 32
  %v785 = vpop.permute.xlu0 %784
  %786 = vrot.lane.b32.xlu0 %v773, 32
  %v787 = vpop.permute.xlu0 %786
  %788 = vrot.lane.b32.xlu0 %v774, 32
  %v789 = vpop.permute.xlu0 %788
  %790 = vrot.lane.b32.xlu0 %v775, 32
  %v791 = vpop.permute.xlu0 %790
  %792 = vrot.lane.b32.xlu0 %v776, 32
  %v793 = vpop.permute.xlu0 %792
  %794 = vrot.lane.b32.xlu0 %v777, 32
  %v795 = vpop.permute.xlu0 %794
  %vm796 = vcmask 261120
  %v797 = vsel %vm796, %v785, %v787
  %v798 = vsel %vm796, %v787, %v789
  %v799 = vsel %vm796, %v791, %v793
  %v800 = vsel %vm796, %v793, %v795
  %v805 = vadd.f32 %v760, %v797
  %v806 = vadd.f32 %v761, %v798
  %v807 = vadd.f32 %v762, %v799
  %v808 = vadd.f32 %v763, %v800
  %vm809 = vcmask 1045504
  %v810 = vsel %vm809, %v807, 0.0
  %v811 = vadd.f32 %v805, %v810
  %v812 = vrot.slane %v811, 4
  %v813 = vadd.f32 %v811, %v812
  %v814 = vrot.slane %v813, 2
  %v815 = vadd.f32 %v813, %v814
  %v816 = vrot.slane %v815, 1
  %v817 = vadd.f32 %v815, %v816
  %v818 = vsel %vm809, %v808, 0.0
  %v819 = vadd.f32 %v806, %v818
  %v820 = vrot.slane %v819, 4
  %v821 = vadd.f32 %v819, %v820
  %v822 = vrot.slane %v821, 2
  %v823 = vadd.f32 %v821, %v822
  %v824 = vrot.slane %v823, 1
  %v825 = vadd.f32 %v823, %v824
  %v826 = vxor.u32 %v817, 2147483648
  %v827 = vxor.u32 %v825, 2147483648
  %v828 = vmul.f32 %v826, 1.442695
  %v829 = vpow.pop %v828
  %v830 = vmul.f32 %v827, 1.442695
  %v831 = vpow.pop %v830
  %v832 = vadd.f32 %v829, 1.0
  %v833 = vadd.f32 %v831, 1.0
  %v834 = vrcp.pop %v832
  %v835 = vmul.f32 1.0, %v834
  %v836 = vrcp.pop %v833
  %v837 = vmul.f32 1.0, %v836
  %v838 = vmul.f32 %v230, %v835
  %v839 = vmul.f32 %v231, %v837
  %v840 = vmul.f32 %v232, %v835
  %v841 = vmul.f32 %v233, %v837
  %v842 = vmul.f32 %v234, %v835
  %v843 = vmul.f32 %v235, %v837
  %v844 = vmul.f32 %v236, %v835
  %v845 = vmul.f32 %v237, %v837
  %846 = vst [vmem:[%s4] sm:$0xff] %v838
  %847 = vst [vmem:[%s4 + $0x8] sm:$0xff] %v839
  %848 = vst [vmem:[%s4 + $0x10] sm:$0xff] %v840
  %849 = vst [vmem:[%s4 + $0x18] sm:$0xff] %v841
  %850 = vst [vmem:[%s4 + $0x20] sm:$0xff] %v842
  %851 = vst [vmem:[%s4 + $0x28] sm:$0xff] %v843
  %852 = vst [vmem:[%s4 + $0x30] sm:$0xff] %v844
  %853 = vst [vmem:[%s4 + $0x38] sm:$0xff] %v845
  %s854 = scalar_lea.vmem %s0, 64
  %v855 = vld [vmem:[%s854] sm:$0xff]
  %v856 = vld [vmem:[%s854 + $0x8] sm:$0xff]
  %v857 = vld [vmem:[%s854 + $0x10] sm:$0xff]
  %v858 = vld [vmem:[%s854 + $0x18] sm:$0xff]
  %v859 = vld [vmem:[%s854 + $0x20] sm:$0xff]
  %v860 = vld [vmem:[%s854 + $0x28] sm:$0xff]
  %v861 = vld [vmem:[%s854 + $0x30] sm:$0xff]
  %v862 = vld [vmem:[%s854 + $0x38] sm:$0xff]
  %v863 = vadd.f32 %v855, %v856
  %864 = vadd.xlane.f32.xlu0 %v863
  %v865 = vpop.xlane.xlu0 %864
  %v866 = vadd.f32 %v857, %v858
  %867 = vadd.xlane.f32.xlu0 %v866
  %v868 = vpop.xlane.xlu0 %867
  %v869 = vadd.f32 %v859, %v860
  %870 = vadd.xlane.f32.xlu0 %v869
  %v871 = vpop.xlane.xlu0 %870
  %v872 = vadd.f32 %v861, %v862
  %873 = vadd.xlane.f32.xlu0 %v872
  %v874 = vpop.xlane.xlu0 %873
  %v875 = vmul.f32 %v865, %v135
  %v876 = vmul.f32 %v868, %v135
  %v877 = vmul.f32 %v871, %v135
  %v878 = vmul.f32 %v874, %v135
  %v879 = vmax.f32 %v855, %v856
  %880 = vmax.xlane.f32.xlu0 %v879
  %v881 = vpop.xlane.xlu0 %880
  %v882 = vmax.f32 %v857, %v858
  %883 = vmax.xlane.f32.xlu0 %v882
  %v884 = vpop.xlane.xlu0 %883
  %v885 = vmax.f32 %v859, %v860
  %886 = vmax.xlane.f32.xlu0 %v885
  %v887 = vpop.xlane.xlu0 %886
  %v888 = vmax.f32 %v861, %v862
  %889 = vmax.xlane.f32.xlu0 %v888
  %v890 = vpop.xlane.xlu0 %889
  %v891 = vmul.f32 %v17, %v875
  %v892 = vmul.f32 %v18, %v876
  %v893 = vmul.f32 %v19, %v877
  %v894 = vmul.f32 %v20, %v878
  %v895 = vsel %vm156, %v891, 0.0
  %v896 = vsel %vm156, %v892, 0.0
  %v897 = vadd.f32 %v895, %v896
  %v898 = vsel %vm156, %v893, 0.0
  %v899 = vadd.f32 %v897, %v898
  %v900 = vsel %vm156, %v894, 0.0
  %v901 = vadd.f32 %v899, %v900
  %v902 = vrot.slane %v901, 4
  %v903 = vadd.f32 %v901, %v902
  %v904 = vrot.slane %v903, 2
  %v905 = vadd.f32 %v903, %v904
  %v906 = vrot.slane %v905, 1
  %v907 = vadd.f32 %v905, %v906
  %v908 = vmax.f32 %v907, 0.0
  %v909 = vmul.f32 %v17, %v881
  %v910 = vmul.f32 %v18, %v884
  %v911 = vmul.f32 %v19, %v887
  %v912 = vmul.f32 %v20, %v890
  %v913 = vsel %vm156, %v909, 0.0
  %v914 = vsel %vm156, %v910, 0.0
  %v915 = vadd.f32 %v913, %v914
  %v916 = vsel %vm156, %v911, 0.0
  %v917 = vadd.f32 %v915, %v916
  %v918 = vsel %vm156, %v912, 0.0
  %v919 = vadd.f32 %v917, %v918
  %v920 = vrot.slane %v919, 4
  %v921 = vadd.f32 %v919, %v920
  %v922 = vrot.slane %v921, 2
  %v923 = vadd.f32 %v921, %v922
  %v924 = vrot.slane %v923, 1
  %v925 = vadd.f32 %v923, %v924
  %v926 = vmax.f32 %v925, 0.0
  %v927 = vadd.f32 %v908, %v926
  %v928 = vmul.f32 %v21, %v927
  %v929 = vmul.f32 %v22, %v927
  %v930 = vmul.f32 %v23, %v927
  %v931 = vmul.f32 %v24, %v927
  %v932 = vsel %vm156, %v928, 0.0
  %933 = vadd.xlane.f32.xlu0 %v932
  %v934 = vpop.xlane.xlu0 %933
  %v935 = vsel %vm156, %v929, 0.0
  %936 = vadd.xlane.f32.xlu0 %v935
  %v937 = vpop.xlane.xlu0 %936
  %v938 = vsel %vm156, %v930, 0.0
  %939 = vadd.xlane.f32.xlu0 %v938
  %v940 = vpop.xlane.xlu0 %939
  %v941 = vsel %vm156, %v931, 0.0
  %942 = vadd.xlane.f32.xlu0 %v941
  %v943 = vpop.xlane.xlu0 %942
  %v944 = vxor.u32 %v934, 2147483648
  %v945 = vxor.u32 %v937, 2147483648
  %v946 = vxor.u32 %v940, 2147483648
  %v947 = vxor.u32 %v943, 2147483648
  %v948 = vmul.f32 %v944, 1.442695
  %v949 = vpow.pop %v948
  %v950 = vmul.f32 %v945, 1.442695
  %v951 = vpow.pop %v950
  %v952 = vmul.f32 %v946, 1.442695
  %v953 = vpow.pop %v952
  %v954 = vmul.f32 %v947, 1.442695
  %v955 = vpow.pop %v954
  %v956 = vadd.f32 %v949, 1.0
  %v957 = vadd.f32 %v951, 1.0
  %v958 = vadd.f32 %v953, 1.0
  %v959 = vadd.f32 %v955, 1.0
  %v960 = vrcp.pop %v956
  %v961 = vmul.f32 1.0, %v960
  %v962 = vrcp.pop %v957
  %v963 = vmul.f32 1.0, %v962
  %v964 = vrcp.pop %v958
  %v965 = vmul.f32 1.0, %v964
  %v966 = vrcp.pop %v959
  %v967 = vmul.f32 1.0, %v966
  %v968 = vmul.f32 %v855, %v961
  %v969 = vmul.f32 %v856, %v961
  %v970 = vmul.f32 %v857, %v963
  %v971 = vmul.f32 %v858, %v963
  %v972 = vmul.f32 %v859, %v965
  %v973 = vmul.f32 %v860, %v965
  %v974 = vmul.f32 %v861, %v967
  %v975 = vmul.f32 %v862, %v967
  %v976 = vadd.f32 %v968, %v970
  %v977 = vadd.f32 %v976, %v972
  %v978 = vadd.f32 %v977, %v974
  %v979 = vrot.slane %v978, 4
  %v980 = vadd.f32 %v978, %v979
  %v981 = vrot.slane %v980, 2
  %v982 = vadd.f32 %v980, %v981
  %v983 = vrot.slane %v982, 1
  %v984 = vadd.f32 %v982, %v983
  %v985 = vadd.f32 %v969, %v971
  %v986 = vadd.f32 %v985, %v973
  %v987 = vadd.f32 %v986, %v975
  %v988 = vrot.slane %v987, 4
  %v989 = vadd.f32 %v987, %v988
  %v990 = vrot.slane %v989, 2
  %v991 = vadd.f32 %v989, %v990
  %v992 = vrot.slane %v991, 1
  %v993 = vadd.f32 %v991, %v992
  %v994 = vmul.f32 %v984, %v256
  %v995 = vmul.f32 %v993, %v256
  %v996 = vmax.f32 %v968, %v972
  %v997 = vmax.f32 %v970, %v974
  %v998 = vmax.f32 %v996, %v997
  %v999 = vrot.slane %v998, 4
  %v1000 = vmax.f32 %v998, %v999
  %v1001 = vrot.slane %v1000, 2
  %v1002 = vmax.f32 %v1000, %v1001
  %v1003 = vrot.slane %v1002, 1
  %v1004 = vmax.f32 %v1002, %v1003
  %v1005 = vmax.f32 %v969, %v973
  %v1006 = vmax.f32 %v971, %v975
  %v1007 = vmax.f32 %v1005, %v1006
  %v1008 = vrot.slane %v1007, 4
  %v1009 = vmax.f32 %v1007, %v1008
  %v1010 = vrot.slane %v1009, 2
  %v1011 = vmax.f32 %v1009, %v1010
  %v1012 = vrot.slane %v1011, 1
  %v1013 = vmax.f32 %v1011, %v1012
  %v1014 = vsel %vm277, %v994, %v1004
  %v1015 = vsel %vm277, %v995, %v1013
  %1018 = vrot.lane.b32.xlu0 %v1014, 51
  %v1019 = vpop.permute.xlu0 %1018
  %1020 = vrot.lane.b32.xlu0 %v1015, 51
  %v1021 = vpop.permute.xlu0 %1020
  %v1022 = vsel %vm286, %v1019, %v1021
  %v1026 = vsel %vm286, 0.0, %v1019
  %v1027 = vsel %vm286, %v1021, 0.0
  %v1028 = vsel %vm296, %v1026, 0.0
  %v1029 = vsel %vm297, %v1022, 0.0
  %v1030 = vsel %vm298, %v1027, 0.0
  %1031 = vst [vmem:[#allocation2] sm:$0x3] %v1028
  %1032 = vst [vmem:[#allocation2 + $0x8] sm:$0x3] %v1029
  %1033 = vst [vmem:[#allocation2 + $0x10] sm:$0x3] %v1030
  %1036 = vrot.lane.b32.xlu0 %v1026, 127
  %v1037 = vpop.permute.xlu0 %1036
  %1038 = vrot.lane.b32.xlu0 %v1022, 127
  %v1039 = vpop.permute.xlu0 %1038
  %1040 = vrot.lane.b32.xlu0 %v1027, 127
  %v1041 = vpop.permute.xlu0 %1040
  %v1042 = vsel %vm322, %v1037, %v1039
  %v1043 = vsel %vm322, %v1039, %v1041
  %v1044 = vsel %vm322, %v1041, %v321
  %v1048 = vsel %vm308, %v1042, 0.0
  %v1049 = vsel %vm309, %v1043, 0.0
  %v1050 = vsel %vm310, %v1044, 0.0
  %v1054 = vrot.slane %v1048, 6
  %v1055 = vrot.slane %v1049, 6
  %v1056 = vrot.slane %v1050, 6
  %1060 = vst [vmem:[#allocation2] sm:$0xc] %v1054
  %1061 = vst [vmem:[#allocation2 + $0x8] sm:$0xc] %v1055
  %1062 = vst [vmem:[#allocation2 + $0x10] sm:$0xc] %v1056
  %1063 = vrot.lane.b32.xlu0 %v1026, 126
  %v1064 = vpop.permute.xlu0 %1063
  %1065 = vrot.lane.b32.xlu0 %v1022, 126
  %v1066 = vpop.permute.xlu0 %1065
  %1067 = vrot.lane.b32.xlu0 %v1027, 126
  %v1068 = vpop.permute.xlu0 %1067
  %v1069 = vsel %vm358, %v1064, %v1066
  %v1070 = vsel %vm358, %v1066, %v1068
  %v1071 = vsel %vm358, %v1068, %v357
  %v1075 = vsel %vm347, %v1069, 0.0
  %v1076 = vsel %vm348, %v1070, 0.0
  %v1077 = vsel %vm349, %v1071, 0.0
  %v1081 = vrot.slane %v1075, 4
  %v1082 = vrot.slane %v1076, 4
  %v1083 = vrot.slane %v1077, 4
  %1087 = vst [vmem:[#allocation2] sm:$0x30] %v1081
  %1088 = vst [vmem:[#allocation2 + $0x8] sm:$0x30] %v1082
  %1089 = vst [vmem:[#allocation2 + $0x10] sm:$0x30] %v1083
  %1090 = vrot.lane.b32.xlu0 %v1026, 125
  %v1091 = vpop.permute.xlu0 %1090
  %1092 = vrot.lane.b32.xlu0 %v1022, 125
  %v1093 = vpop.permute.xlu0 %1092
  %1094 = vrot.lane.b32.xlu0 %v1027, 125
  %v1095 = vpop.permute.xlu0 %1094
  %v1096 = vsel %vm394, %v1091, %v1093
  %v1097 = vsel %vm394, %v1093, %v1095
  %v1098 = vsel %vm394, %v1095, %v393
  %v1102 = vsel %vm383, %v1096, 0.0
  %v1103 = vsel %vm384, %v1097, 0.0
  %v1104 = vsel %vm385, %v1098, 0.0
  %v1108 = vrot.slane %v1102, 2
  %v1109 = vrot.slane %v1103, 2
  %v1110 = vrot.slane %v1104, 2
  %1114 = vst [vmem:[#allocation2] sm:$0xc0] %v1108
  %1115 = vst [vmem:[#allocation2 + $0x8] sm:$0xc0] %v1109
  %1116 = vst [vmem:[#allocation2 + $0x10] sm:$0xc0] %v1110
  %1117 = vrot.lane.b32.xlu0 %v1026, 124
  %v1118 = vpop.permute.xlu0 %1117
  %1119 = vrot.lane.b32.xlu0 %v1022, 124
  %v1120 = vpop.permute.xlu0 %1119
  %1121 = vrot.lane.b32.xlu0 %v1027, 124
  %v1122 = vpop.permute.xlu0 %1121
  %v1123 = vsel %vm430, %v1118, %v1120
  %v1124 = vsel %vm430, %v1120, %v1122
  %v1125 = vsel %vm430, %v1122, %v429
  %v1129 = vsel %vm419, %v1123, 0.0
  %v1130 = vsel %vm420, %v1124, 0.0
  %v1131 = vsel %vm421, %v1125, 0.0
  %1132 = vst [vmem:[#allocation2 + $0x18] sm:$0x3] %v1129
  %1133 = vst [vmem:[#allocation2 + $0x20] sm:$0x3] %v1130
  %1134 = vst [vmem:[#allocation2 + $0x28] sm:$0x3] %v1131
  %1135 = vrot.lane.b32.xlu0 %v1026, 123
  %v1136 = vpop.permute.xlu0 %1135
  %1137 = vrot.lane.b32.xlu0 %v1022, 123
  %v1138 = vpop.permute.xlu0 %1137
  %1139 = vrot.lane.b32.xlu0 %v1027, 123
  %v1140 = vpop.permute.xlu0 %1139
  %v1141 = vsel %vm457, %v1136, %v1138
  %v1142 = vsel %vm457, %v1138, %v1140
  %v1143 = vsel %vm457, %v1140, %v456
  %v1147 = vsel %vm446, %v1141, 0.0
  %v1148 = vsel %vm447, %v1142, 0.0
  %v1149 = vsel %vm448, %v1143, 0.0
  %v1153 = vrot.slane %v1147, 6
  %v1154 = vrot.slane %v1148, 6
  %v1155 = vrot.slane %v1149, 6
  %1159 = vst [vmem:[#allocation2 + $0x18] sm:$0xc] %v1153
  %1160 = vst [vmem:[#allocation2 + $0x20] sm:$0xc] %v1154
  %1161 = vst [vmem:[#allocation2 + $0x28] sm:$0xc] %v1155
  %1162 = vrot.lane.b32.xlu0 %v1026, 122
  %v1163 = vpop.permute.xlu0 %1162
  %1164 = vrot.lane.b32.xlu0 %v1022, 122
  %v1165 = vpop.permute.xlu0 %1164
  %1166 = vrot.lane.b32.xlu0 %v1027, 122
  %v1167 = vpop.permute.xlu0 %1166
  %v1168 = vsel %vm493, %v1163, %v1165
  %v1169 = vsel %vm493, %v1165, %v1167
  %v1170 = vsel %vm493, %v1167, %v492
  %v1174 = vsel %vm482, %v1168, 0.0
  %v1175 = vsel %vm483, %v1169, 0.0
  %v1176 = vsel %vm484, %v1170, 0.0
  %v1180 = vrot.slane %v1174, 4
  %v1181 = vrot.slane %v1175, 4
  %v1182 = vrot.slane %v1176, 4
  %1186 = vst [vmem:[#allocation2 + $0x18] sm:$0x30] %v1180
  %1187 = vst [vmem:[#allocation2 + $0x20] sm:$0x30] %v1181
  %1188 = vst [vmem:[#allocation2 + $0x28] sm:$0x30] %v1182
  %v1189 = vld [vmem:[#allocation2] sm:$0xff]
  %v1190 = vld [vmem:[#allocation2 + $0x8] sm:$0xff]
  %v1191 = vld [vmem:[#allocation2 + $0x10] sm:$0xff]
  %v1192 = vld [vmem:[#allocation2 + $0x18] sm:$0x3f]
  %v1193 = vld [vmem:[#allocation2 + $0x20] sm:$0x3f]
  %v1194 = vld [vmem:[#allocation2 + $0x28] sm:$0x3f]
  %v1195 = vmul.f32 %v1189, %v524
  %v1196 = vmul.f32 %v1190, %v524
  %v1197 = vmul.f32 %v1192, %v529
  %v1198 = vmul.f32 %v1193, %v529
  %v1199 = vadd.f32 %v1195, 0.0
  %v1200 = vadd.f32 %v1196, 0.0
  %v1201 = vadd.f32 %v1197, 0.0
  %v1202 = vadd.f32 %v1198, 0.0
  %v1203 = vmul.f32 %v1189, %v541
  %v1204 = vmul.f32 %v1190, %v541
  %v1205 = vmul.f32 %v1191, %v541
  %v1206 = vmul.f32 %v1192, %v545
  %v1207 = vmul.f32 %v1193, %v545
  %v1208 = vmul.f32 %v1194, %v545
  %1215 = vrot.lane.b32.xlu0 %v1203, 112
  %v1216 = vpop.permute.xlu0 %1215
  %1217 = vrot.lane.b32.xlu0 %v1204, 112
  %v1218 = vpop.permute.xlu0 %1217
  %1219 = vrot.lane.b32.xlu0 %v1205, 112
  %v1220 = vpop.permute.xlu0 %1219
  %1221 = vrot.lane.b32.xlu0 %v1206, 112
  %v1222 = vpop.permute.xlu0 %1221
  %1223 = vrot.lane.b32.xlu0 %v1207, 112
  %v1224 = vpop.permute.xlu0 %1223
  %1225 = vrot.lane.b32.xlu0 %v1208, 112
  %v1226 = vpop.permute.xlu0 %1225
  %v1227 = vsel %vm571, %v1216, %v1218
  %v1228 = vsel %vm571, %v1218, %v1220
  %v1229 = vsel %vm571, %v1222, %v1224
  %v1230 = vsel %vm571, %v1224, %v1226
  %v1235 = vadd.f32 %v1199, %v1227
  %v1236 = vadd.f32 %v1200, %v1228
  %v1237 = vadd.f32 %v1201, %v1229
  %v1238 = vadd.f32 %v1202, %v1230
  %v1239 = vmul.f32 %v1189, %v586
  %v1240 = vmul.f32 %v1190, %v586
  %v1241 = vmul.f32 %v1191, %v586
  %v1242 = vmul.f32 %v1192, %v590
  %v1243 = vmul.f32 %v1193, %v590
  %v1244 = vmul.f32 %v1194, %v590
  %1251 = vrot.lane.b32.xlu0 %v1239, 96
  %v1252 = vpop.permute.xlu0 %1251
  %1253 = vrot.lane.b32.xlu0 %v1240, 96
  %v1254 = vpop.permute.xlu0 %1253
  %1255 = vrot.lane.b32.xlu0 %v1241, 96
  %v1256 = vpop.permute.xlu0 %1255
  %1257 = vrot.lane.b32.xlu0 %v1242, 96
  %v1258 = vpop.permute.xlu0 %1257
  %1259 = vrot.lane.b32.xlu0 %v1243, 96
  %v1260 = vpop.permute.xlu0 %1259
  %1261 = vrot.lane.b32.xlu0 %v1244, 96
  %v1262 = vpop.permute.xlu0 %1261
  %v1263 = vsel %vm616, %v1252, %v1254
  %v1264 = vsel %vm616, %v1254, %v1256
  %v1265 = vsel %vm616, %v1258, %v1260
  %v1266 = vsel %vm616, %v1260, %v1262
  %v1271 = vadd.f32 %v1235, %v1263
  %v1272 = vadd.f32 %v1236, %v1264
  %v1273 = vadd.f32 %v1237, %v1265
  %v1274 = vadd.f32 %v1238, %v1266
  %v1275 = vmul.f32 %v1189, %v631
  %v1276 = vmul.f32 %v1190, %v631
  %v1277 = vmul.f32 %v1191, %v631
  %v1278 = vmul.f32 %v1192, %v635
  %v1279 = vmul.f32 %v1193, %v635
  %v1280 = vmul.f32 %v1194, %v635
  %1287 = vrot.lane.b32.xlu0 %v1275, 80
  %v1288 = vpop.permute.xlu0 %1287
  %1289 = vrot.lane.b32.xlu0 %v1276, 80
  %v1290 = vpop.permute.xlu0 %1289
  %1291 = vrot.lane.b32.xlu0 %v1277, 80
  %v1292 = vpop.permute.xlu0 %1291
  %1293 = vrot.lane.b32.xlu0 %v1278, 80
  %v1294 = vpop.permute.xlu0 %1293
  %1295 = vrot.lane.b32.xlu0 %v1279, 80
  %v1296 = vpop.permute.xlu0 %1295
  %1297 = vrot.lane.b32.xlu0 %v1280, 80
  %v1298 = vpop.permute.xlu0 %1297
  %v1299 = vsel %vm661, %v1288, %v1290
  %v1300 = vsel %vm661, %v1290, %v1292
  %v1301 = vsel %vm661, %v1294, %v1296
  %v1302 = vsel %vm661, %v1296, %v1298
  %v1307 = vadd.f32 %v1271, %v1299
  %v1308 = vadd.f32 %v1272, %v1300
  %v1309 = vadd.f32 %v1273, %v1301
  %v1310 = vadd.f32 %v1274, %v1302
  %v1311 = vmul.f32 %v1189, %v676
  %v1312 = vmul.f32 %v1190, %v676
  %v1313 = vmul.f32 %v1191, %v676
  %v1314 = vmul.f32 %v1192, %v680
  %v1315 = vmul.f32 %v1193, %v680
  %v1316 = vmul.f32 %v1194, %v680
  %1323 = vrot.lane.b32.xlu0 %v1311, 64
  %v1324 = vpop.permute.xlu0 %1323
  %1325 = vrot.lane.b32.xlu0 %v1312, 64
  %v1326 = vpop.permute.xlu0 %1325
  %1327 = vrot.lane.b32.xlu0 %v1313, 64
  %v1328 = vpop.permute.xlu0 %1327
  %1329 = vrot.lane.b32.xlu0 %v1314, 64
  %v1330 = vpop.permute.xlu0 %1329
  %1331 = vrot.lane.b32.xlu0 %v1315, 64
  %v1332 = vpop.permute.xlu0 %1331
  %1333 = vrot.lane.b32.xlu0 %v1316, 64
  %v1334 = vpop.permute.xlu0 %1333
  %v1335 = vsel %vm706, %v1324, %v1326
  %v1336 = vsel %vm706, %v1326, %v1328
  %v1337 = vsel %vm706, %v1330, %v1332
  %v1338 = vsel %vm706, %v1332, %v1334
  %v1343 = vadd.f32 %v1307, %v1335
  %v1344 = vadd.f32 %v1308, %v1336
  %v1345 = vadd.f32 %v1309, %v1337
  %v1346 = vadd.f32 %v1310, %v1338
  %v1347 = vmul.f32 %v1189, %v721
  %v1348 = vmul.f32 %v1190, %v721
  %v1349 = vmul.f32 %v1191, %v721
  %v1350 = vmul.f32 %v1192, %v725
  %v1351 = vmul.f32 %v1193, %v725
  %v1352 = vmul.f32 %v1194, %v725
  %1359 = vrot.lane.b32.xlu0 %v1347, 48
  %v1360 = vpop.permute.xlu0 %1359
  %1361 = vrot.lane.b32.xlu0 %v1348, 48
  %v1362 = vpop.permute.xlu0 %1361
  %1363 = vrot.lane.b32.xlu0 %v1349, 48
  %v1364 = vpop.permute.xlu0 %1363
  %1365 = vrot.lane.b32.xlu0 %v1350, 48
  %v1366 = vpop.permute.xlu0 %1365
  %1367 = vrot.lane.b32.xlu0 %v1351, 48
  %v1368 = vpop.permute.xlu0 %1367
  %1369 = vrot.lane.b32.xlu0 %v1352, 48
  %v1370 = vpop.permute.xlu0 %1369
  %v1371 = vsel %vm751, %v1360, %v1362
  %v1372 = vsel %vm751, %v1362, %v1364
  %v1373 = vsel %vm751, %v1366, %v1368
  %v1374 = vsel %vm751, %v1368, %v1370
  %v1379 = vadd.f32 %v1343, %v1371
  %v1380 = vadd.f32 %v1344, %v1372
  %v1381 = vadd.f32 %v1345, %v1373
  %v1382 = vadd.f32 %v1346, %v1374
  %v1383 = vmul.f32 %v1189, %v766
  %v1384 = vmul.f32 %v1190, %v766
  %v1385 = vmul.f32 %v1191, %v766
  %v1386 = vmul.f32 %v1192, %v770
  %v1387 = vmul.f32 %v1193, %v770
  %v1388 = vmul.f32 %v1194, %v770
  %1395 = vrot.lane.b32.xlu0 %v1383, 32
  %v1396 = vpop.permute.xlu0 %1395
  %1397 = vrot.lane.b32.xlu0 %v1384, 32
  %v1398 = vpop.permute.xlu0 %1397
  %1399 = vrot.lane.b32.xlu0 %v1385, 32
  %v1400 = vpop.permute.xlu0 %1399
  %1401 = vrot.lane.b32.xlu0 %v1386, 32
  %v1402 = vpop.permute.xlu0 %1401
  %1403 = vrot.lane.b32.xlu0 %v1387, 32
  %v1404 = vpop.permute.xlu0 %1403
  %1405 = vrot.lane.b32.xlu0 %v1388, 32
  %v1406 = vpop.permute.xlu0 %1405
  %v1407 = vsel %vm796, %v1396, %v1398
  %v1408 = vsel %vm796, %v1398, %v1400
  %v1409 = vsel %vm796, %v1402, %v1404
  %v1410 = vsel %vm796, %v1404, %v1406
  %v1415 = vadd.f32 %v1379, %v1407
  %v1416 = vadd.f32 %v1380, %v1408
  %v1417 = vadd.f32 %v1381, %v1409
  %v1418 = vadd.f32 %v1382, %v1410
  %v1419 = vsel %vm809, %v1417, 0.0
  %v1420 = vadd.f32 %v1415, %v1419
  %v1421 = vrot.slane %v1420, 4
  %v1422 = vadd.f32 %v1420, %v1421
  %v1423 = vrot.slane %v1422, 2
  %v1424 = vadd.f32 %v1422, %v1423
  %v1425 = vrot.slane %v1424, 1
  %v1426 = vadd.f32 %v1424, %v1425
  %v1427 = vsel %vm809, %v1418, 0.0
  %v1428 = vadd.f32 %v1416, %v1427
  %v1429 = vrot.slane %v1428, 4
  %v1430 = vadd.f32 %v1428, %v1429
  %v1431 = vrot.slane %v1430, 2
  %v1432 = vadd.f32 %v1430, %v1431
  %v1433 = vrot.slane %v1432, 1
  %v1434 = vadd.f32 %v1432, %v1433
  %v1435 = vxor.u32 %v1426, 2147483648
  %v1436 = vxor.u32 %v1434, 2147483648
  %v1437 = vmul.f32 %v1435, 1.442695
  %v1438 = vpow.pop %v1437
  %v1439 = vmul.f32 %v1436, 1.442695
  %v1440 = vpow.pop %v1439
  %v1441 = vadd.f32 %v1438, 1.0
  %v1442 = vadd.f32 %v1440, 1.0
  %v1443 = vrcp.pop %v1441
  %v1444 = vmul.f32 1.0, %v1443
  %v1445 = vrcp.pop %v1442
  %v1446 = vmul.f32 1.0, %v1445
  %v1447 = vmul.f32 %v968, %v1444
  %v1448 = vmul.f32 %v969, %v1446
  %v1449 = vmul.f32 %v970, %v1444
  %v1450 = vmul.f32 %v971, %v1446
  %v1451 = vmul.f32 %v972, %v1444
  %v1452 = vmul.f32 %v973, %v1446
  %v1453 = vmul.f32 %v974, %v1444
  %v1454 = vmul.f32 %v975, %v1446
  %s1455 = scalar_lea.vmem %s4, 64
  %1456 = vst [vmem:[%s1455] sm:$0xff] %v1447
  %1457 = vst [vmem:[%s1455 + $0x8] sm:$0xff] %v1448
  %1458 = vst [vmem:[%s1455 + $0x10] sm:$0xff] %v1449
  %1459 = vst [vmem:[%s1455 + $0x18] sm:$0xff] %v1450
  %1460 = vst [vmem:[%s1455 + $0x20] sm:$0xff] %v1451
  %1461 = vst [vmem:[%s1455 + $0x28] sm:$0xff] %v1452
  %1462 = vst [vmem:[%s1455 + $0x30] sm:$0xff] %v1453
  %1463 = vst [vmem:[%s1455 + $0x38] sm:$0xff] %v1454
  // Predicated region
  $region18: #{cbam_pallas.1} parent=0 // pred_check
    _
  $region19: #{cbam_pallas.1} parent=0 // pred_check_branch
    %1465 = sbr.rel (0) target = $region21
  $region20: #{cbam_pallas.1} parent=0 // pred_region
    _
  $region21: #{cbam_pallas.1} parent=0 // pred_fallthru
    _
  // Predicated region
  $region22: #{cbam_pallas.1} parent=0 // pred_check
    _
  $region23: #{cbam_pallas.1} parent=0 // pred_check_branch
    %1467 = sbr.rel (0) target = $region25
  $region24: #{cbam_pallas.1} parent=0 // pred_region
    _
  $region25: #{cbam_pallas.1} parent=0 // pred_fallthru
    _

</llo_original>
